<compile_context>
chip_gen: v7x
topology: tpu7x:2x2x1
jax: 0.10.0
libtpu: 0.0.40
codegen_flags: <defaults>
</compile_context>

<pallas_src>
import numpy as np
import jax
import jax.numpy as jnp
from jax.experimental import pallas as pl
from jax.experimental.pallas import tpu as pltpu


WIN_SIZE = 11
WIN_SIGMA = 1.5
DATA_RANGE = 255.0
K1, K2 = 0.01, 0.03


def _round_up(x, m):
    return ((x + m - 1) // m) * m


def _fspecial_gauss_1d(size, sigma):
    """1-D Gaussian window, normalized (same math as the PyTorch helper)."""
    coords = np.arange(size, dtype=np.float32) - (size // 2)
    g = np.exp(-(coords ** 2) / (2.0 * sigma ** 2)).astype(np.float32)
    return g / g.sum()


def _toeplitz_bands(H, W, win, Hp, Houtp, Woutp):
    """Banded matrices so (Bh @ img @ Bw)[i, j] = sum_{a,b} win[a]*win[b]*img[i+a, j+b]
    (same valid cross-correlation as F.conv2d(win) then F.conv2d(win.T)).
    Bh: (Houtp, Hp), Bw: (W, Woutp); rows/cols beyond (Hout, Wout) / H are zero,
    so padded output rows/cols blur to exactly 0."""
    n = win.shape[0]
    Hout, Wout = H - n + 1, W - n + 1
    Bh = np.zeros((Houtp, Hp), np.float32)   # left-multiply: H-axis pass
    Bw = np.zeros((W, Woutp), np.float32)    # right-multiply: W-axis pass
    for k in range(n):
        Bh[np.arange(Hout), np.arange(Hout) + k] = win[k]
        Bw[np.arange(Wout) + k, np.arange(Wout)] = win[k]
    return Bh, Bw


def _vmem_budget_bytes():
    """Per-generation VMEM budget: device capacity minus compiler headroom."""
    try:
        info = pltpu.get_tpu_info()
        cap = getattr(info, "vmem_capacity_bytes", None) or getattr(info, "vmem_bytes", None)
        if cap:
            return max(32 << 20, int(cap) - (12 << 20))
    except Exception:
        pass
    return 52 << 20   # conservative default: fits v7x's 64 MiB/core with headroom


def _make_ssim_kernel(Cb, Hp, Hout, Wout, Houtp, Woutp, C1, C2):
    """Pallas kernel: one (Cb*Hp, W) plane-stack (all channels) per grid step."""
    inv_count = 1.0 / float(Hout * Wout)
    padded = (Houtp != Hout) or (Woutp != Wout)

    def kernel(x_ref, y_ref, bh_ref, bw_ref, out_ref):
        bh = bh_ref[...]                                     # (Houtp, Hp) f32
        bw = bw_ref[...]                                     # (W, Woutp) f32
        xf = x_ref[...].astype(jnp.float32)                  # (Cb*Hp, W)
        yf = y_ref[...].astype(jnp.float32)

        # --- W-axis (lane) Gaussian pass: 5 direct MXU dots, all channels at
        # once (M = Cb*Hp already fills the MXU M dimension; no row concat).
        dot_w = lambda a: jnp.dot(a, bw, preferred_element_type=jnp.float32)
        tx, ty = dot_w(xf), dot_w(yf)
        txx, tyy, txy = dot_w(xf * xf), dot_w(yf * yf), dot_w(xf * yf)  # (Cb*Hp, Woutp)

        # Hoisted out of the channel loop: validity mask for the padded SSIM
        # map and the lane index used to scatter per-channel means.
        if padded:
            rows = jax.lax.broadcasted_iota(jnp.int32, (Houtp, Woutp), 0)
            cols = jax.lax.broadcasted_iota(jnp.int32, (Houtp, Woutp), 1)
            valid = jnp.logical_and(rows < Hout, cols < Wout).astype(jnp.float32)
        ch_idx = jax.lax.broadcasted_iota(jnp.int32, (1, Cb), 1)

        acc = jnp.zeros((1, Cb), jnp.float32)
        for c in range(Cb):
            lo = c * Hp                     # Hp % 8 == 0 -> aligned, zero-cost views
            hi = lo + Hp
            # --- batched H-axis pass: one MXU dot per channel over the five
            # lane-concatenated W-pass results (lane width 5*Woutp, 128-aligned).
            rhs = jnp.concatenate(
                [tx[lo:hi], ty[lo:hi], txx[lo:hi], tyy[lo:hi], txy[lo:hi]], axis=1)
            blur = jnp.dot(bh, rhs, preferred_element_type=jnp.float32)  # (Houtp, 5*Woutp)

            mu1 = blur[:, 0 * Woutp:1 * Woutp]
            mu2 = blur[:, 1 * Woutp:2 * Woutp]
            mu1_sq = mu1 * mu1
            mu2_sq = mu2 * mu2
            mu1_mu2 = mu1 * mu2
            sigma1_sq = blur[:, 2 * Woutp:3 * Woutp] - mu1_sq
            sigma2_sq = blur[:, 3 * Woutp:4 * Woutp] - mu2_sq
            sigma12 = blur[:, 4 * Woutp:5 * Woutp] - mu1_mu2
            cs_map = (2.0 * sigma12 + C2) / (sigma1_sq + sigma2_sq + C2)
            ssim_map = (2.0 * mu1_mu2 + C1) / (mu1_sq + mu2_sq + C1) * cs_map
            if padded:
                ssim_map = ssim_map * valid           # zero the padded rows/cols
            mean_c = jnp.sum(ssim_map, keepdims=True) * inv_count      # (1, 1)
            acc = acc + jnp.where(ch_idx == c, mean_c, 0.0)

        out_ref[...] = acc                            # single (1, Cb) store per step

    return kernel


def ssim_pallas(X, Y, *, data_range=DATA_RANGE, win_size=WIN_SIZE,
                win_sigma=WIN_SIGMA, K=(K1, K2), size_average=True,
                nonnegative_ssim=False):
    """Equivalent of SSIM(...)(X, Y) with the module defaults. X, Y: (N, C, H, W)."""
    N, C, H, W = X.shape
    assert H >= win_size and W >= win_size, "spatial dims must be >= win_size"
    Hout, Wout = H - win_size + 1, W - win_size + 1

    # Lane/sublane-dense padded extents (zero bands in Bh/Bw).
    Hp = _round_up(H, 8)
    Houtp = _round_up(Hout, 8)
    Woutp = _round_up(Wout, 128)

    # Fold small problems: stack all batch elements along the row axis (exactly
    # like channels) so one grid step amortizes the ~0.35 us per-step overhead.
    in_isz = int(np.dtype(X.dtype).itemsize)
    fold = (N > 1) and (N * C * Hp * W * max(in_isz, 4) <= (2 << 20))
    Nb, Cb = (1, N * C) if fold else (N, C)

    win = _fspecial_gauss_1d(win_size, win_sigma)
    Bh_np, Bw_np = _toeplitz_bands(H, W, win, Hp, Houtp, Woutp)
    Bh, Bw = jnp.asarray(Bh_np), jnp.asarray(Bw_np)

    # Keep inputs in their native dtype (cast inside the kernel) and present
    # each image as a (Cb*Hp, W) row-stack of per-channel planes.
    Xr, Yr = X, Y
    if Hp != H:
        pad = ((0, 0), (0, 0), (0, Hp - H), (0, 0))
        Xr, Yr = jnp.pad(Xr, pad), jnp.pad(Yr, pad)
    X2 = Xr.reshape(Nb, Cb * Hp, W)
    Y2 = Yr.reshape(Nb, Cb * Hp, W)

    C1c = float((K[0] * data_range) ** 2)
    C2c = float((K[1] * data_range) ** 2)
    kernel = _make_ssim_kernel(Cb, Hp, Hout, Wout, Houtp, Woutp, C1c, C2c)

    # Working set: only pipelined blocks are double-buffered; in-kernel
    # temporaries are counted once.
    block_in = Cb * Hp * W
    work_bytes = (
        2 * 2 * block_in * in_isz             # x & y input blocks (double-buffered)
        + 2 * block_in * 4                    # f32 casts of x & y
        + block_in * 4                        # one elementwise product operand
        + 5 * Cb * Hp * Woutp * 4             # W-pass results
        + (Hp + Houtp) * 5 * Woutp * 4        # per-channel concat RHS + H-pass result
        + 8 * Houtp * Woutp * 4               # SSIM-map temporaries
        + 2 * (Houtp * Hp + W * Woutp) * 4    # band matrices (grid-invariant)
        + 2 * Cb * 4                          # output block
    )
    vmem_limit = int(min(_vmem_budget_bytes(),
                         max(16 << 20, work_bytes + (4 << 20))))

    per_channel = pl.pallas_call(
        kernel,
        out_shape=jax.ShapeDtypeStruct((Nb, 1, Cb), jnp.float32),
        grid_spec=pltpu.PrefetchScalarGridSpec(
            num_scalar_prefetch=0,
            grid=(Nb,),
            in_specs=[
                pl.BlockSpec((None, Cb * Hp, W), lambda n: (n, 0, 0)),
                pl.BlockSpec((None, Cb * Hp, W), lambda n: (n, 0, 0)),
                pl.BlockSpec((Houtp, Hp), lambda n: (0, 0)),
                pl.BlockSpec((W, Woutp), lambda n: (0, 0)),
            ],
            out_specs=pl.BlockSpec((None, 1, Cb), lambda n: (n, 0, 0)),
        ),
        compiler_params=pltpu.CompilerParams(
            dimension_semantics=("parallel",),
            vmem_limit_bytes=vmem_limit),
    )(X2, Y2, Bh, Bw)

    ssim_per_channel = per_channel.reshape(N, C)   # == torch.flatten(ssim_map, 2).mean(-1)
    if nonnegative_ssim:
        ssim_per_channel = jnp.maximum(ssim_per_channel, 0.0)
    if size_average:
        return jnp.mean(ssim_per_channel)
    return jnp.mean(ssim_per_channel, axis=1)


def _ssim_reference_jax(X, Y, *, data_range=DATA_RANGE, win_size=WIN_SIZE,
                        win_sigma=WIN_SIGMA, K=(K1, K2)):
    """Pure-JAX reference (shift-add blur, no Pallas) for a correctness check."""
    win = jnp.asarray(_fspecial_gauss_1d(win_size, win_sigma))
    X = X.astype(jnp.float32)
    Y = Y.astype(jnp.float32)
    N, C, H, W = X.shape
    Hout, Wout = H - win_size + 1, W - win_size + 1

    def blur(img):  # img: (N, C, H, W)
        h = sum(win[k] * img[:, :, :, k:k + Wout] for k in range(win_size))
        v = sum(win[k] * h[:, :, k:k + Hout, :] for k in range(win_size))
        return v

    C1c = (K[0] * data_range) ** 2
    C2c = (K[1] * data_range) ** 2
    mu1, mu2 = blur(X), blur(Y)
    s1 = blur(X * X) - mu1 ** 2
    s2 = blur(Y * Y) - mu2 ** 2
    s12 = blur(X * Y) - mu1 * mu2
    cs_map = (2 * s12 + C2c) / (s1 + s2 + C2c)
    ssim_map = (2 * mu1 * mu2 + C1c) / (mu1 ** 2 + mu2 ** 2 + C1c) * cs_map
    return jnp.mean(ssim_map.reshape(N, C, -1).mean(-1))


if __name__ == "__main__":
    key = jax.random.PRNGKey(0)
    kx, kn = jax.random.split(key)
    N, C, H, W = 2, 3, 16, 16   # channel=3 matches SSIM() default; H, W >= win_size
    X = jax.random.uniform(kx, (N, C, H, W), jnp.float32, 0.0, 255.0)
    noise = jax.random.uniform(kn, (N, C, H, W), jnp.float32, -20.0, 20.0)
    Y = jnp.clip(X + noise, 0.0, 255.0)   # correlated pair -> SSIM ~ 0.9, meaningful check

    out = jax.block_until_ready(ssim_pallas(X, Y))
    ref = jax.block_until_ready(_ssim_reference_jax(X, Y))

    # MXU f32 matmuls may use multi-pass bf16 accumulation; allow a small tolerance
    # versus the pure elementwise f32 reference.
    assert np.allclose(np.asarray(out), np.asarray(ref), rtol=5e-3, atol=5e-3), (
        f"pallas={out} ref={ref}")

    print("KERNEL_OK")
</pallas_src>

<mosaic_0001>
module attributes {stable_mosaic.version = 11 : i64} {
  func.func @kernel(%arg0: i32, %arg1: memref<1x96x16xf32, #tpu.memory_space<vmem>>, %arg2: memref<1x96x16xf32, #tpu.memory_space<vmem>>, %arg3: memref<8x16xf32, #tpu.memory_space<vmem>>, %arg4: memref<16x128xf32, #tpu.memory_space<vmem>>, %arg5: memref<1x1x6xf32, #tpu.memory_space<vmem>>) attributes {dimension_semantics = [#tpu.dimension_semantics<parallel>], iteration_bounds = array<i64: 1>, scalar_prefetch = 0 : i64, scratch_operands = 0 : i64, tpu.core_type = #tpu.core_type<tc>, window_params = [{transform_indices = @transform_0, window_bounds = array<i64: 1, 96, 16>}, {transform_indices = @transform_1, window_bounds = array<i64: 1, 96, 16>}, {pipeline_mode = #tpu.pipeline_mode<synchronous>, transform_indices = @transform_2, window_bounds = array<i64: 8, 16>}, {pipeline_mode = #tpu.pipeline_mode<synchronous>, transform_indices = @transform_3, window_bounds = array<i64: 16, 128>}, {transform_indices = @transform_4, window_bounds = array<i64: 1, 1, 6>}]} {
    %c0 = arith.constant 0 : index
    %c0_0 = arith.constant 0 : index
    %0 = vector.load %arg3[%c0, %c0_0] : memref<8x16xf32, #tpu.memory_space<vmem>>, vector<8x16xf32>
    %c0_1 = arith.constant 0 : index
    %c0_2 = arith.constant 0 : index
    %1 = vector.load %arg4[%c0_1, %c0_2] : memref<16x128xf32, #tpu.memory_space<vmem>>, vector<16x128xf32>
    %c0_3 = arith.constant 0 : index
    %c0_4 = arith.constant 0 : index
    %c0_5 = arith.constant 0 : index
    %2 = vector.load %arg1[%c0_3, %c0_4, %c0_5] : memref<1x96x16xf32, #tpu.memory_space<vmem>>, vector<1x96x16xf32>
    %3 = vector.shape_cast %2 : vector<1x96x16xf32> to vector<96x16xf32>
    %c0_6 = arith.constant 0 : index
    %c0_7 = arith.constant 0 : index
    %c0_8 = arith.constant 0 : index
    %4 = vector.load %arg2[%c0_6, %c0_7, %c0_8] : memref<1x96x16xf32, #tpu.memory_space<vmem>>, vector<1x96x16xf32>
    %5 = vector.shape_cast %4 : vector<1x96x16xf32> to vector<96x16xf32>
    %cst = arith.constant dense<0.000000e+00> : vector<96x128xf32>
    %6 = tpu.matmul %3, %1, %cst {dimension_numbers = #tpu.dot_dimension_numbers<[1], [0], [0], [1], [0, 0, 1, 1], [], []>} : vector<96x16xf32>, vector<16x128xf32>, vector<96x128xf32> -> vector<96x128xf32>
    %cst_9 = arith.constant dense<0.000000e+00> : vector<96x128xf32>
    %7 = tpu.matmul %5, %1, %cst_9 {dimension_numbers = #tpu.dot_dimension_numbers<[1], [0], [0], [1], [0, 0, 1, 1], [], []>} : vector<96x16xf32>, vector<16x128xf32>, vector<96x128xf32> -> vector<96x128xf32>
    %8 = arith.mulf %3, %3 : vector<96x16xf32>
    %cst_10 = arith.constant dense<0.000000e+00> : vector<96x128xf32>
    %9 = tpu.matmul %8, %1, %cst_10 {dimension_numbers = #tpu.dot_dimension_numbers<[1], [0], [0], [1], [0, 0, 1, 1], [], []>} : vector<96x16xf32>, vector<16x128xf32>, vector<96x128xf32> -> vector<96x128xf32>
    %10 = arith.mulf %5, %5 : vector<96x16xf32>
    %cst_11 = arith.constant dense<0.000000e+00> : vector<96x128xf32>
    %11 = tpu.matmul %10, %1, %cst_11 {dimension_numbers = #tpu.dot_dimension_numbers<[1], [0], [0], [1], [0, 0, 1, 1], [], []>} : vector<96x16xf32>, vector<16x128xf32>, vector<96x128xf32> -> vector<96x128xf32>
    %12 = arith.mulf %3, %5 : vector<96x16xf32>
    %cst_12 = arith.constant dense<0.000000e+00> : vector<96x128xf32>
    %13 = tpu.matmul %12, %1, %cst_12 {dimension_numbers = #tpu.dot_dimension_numbers<[1], [0], [0], [1], [0, 0, 1, 1], [], []>} : vector<96x16xf32>, vector<16x128xf32>, vector<96x128xf32> -> vector<96x128xf32>
    %14 = tpu.iota {dimensions = array<i32: 0>} : vector<8x128xi32>
    %15 = tpu.iota {dimensions = array<i32: 1>} : vector<8x128xi32>
    %c6_i32 = arith.constant 6 : i32
    %16 = vector.broadcast %c6_i32 : i32 to vector<8x128xi32>
    %17 = arith.cmpi slt, %14, %16 : vector<8x128xi32>
    %c6_i32_13 = arith.constant 6 : i32
    %18 = vector.broadcast %c6_i32_13 : i32 to vector<8x128xi32>
    %19 = arith.cmpi slt, %15, %18 : vector<8x128xi32>
    %20 = arith.andi %17, %19 : vector<8x128xi1>
    %21 = arith.extui %20 : vector<8x128xi1> to vector<8x128xi32>
    %22 = arith.sitofp %21 : vector<8x128xi32> to vector<8x128xf32>
    %23 = tpu.iota {dimensions = array<i32: 1>} : vector<1x6xi32>
    %cst_14 = arith.constant 0.000000e+00 : f32
    %24 = vector.broadcast %cst_14 : f32 to vector<1x6xf32>
    %25 = vector.extract_strided_slice %6 {offsets = [0, 0], sizes = [16, 128], strides = [1, 1]} : vector<96x128xf32> to vector<16x128xf32>
    %26 = vector.extract_strided_slice %7 {offsets = [0, 0], sizes = [16, 128], strides = [1, 1]} : vector<96x128xf32> to vector<16x128xf32>
    %27 = vector.extract_strided_slice %9 {offsets = [0, 0], sizes = [16, 128], strides = [1, 1]} : vector<96x128xf32> to vector<16x128xf32>
    %28 = vector.extract_strided_slice %11 {offsets = [0, 0], sizes = [16, 128], strides = [1, 1]} : vector<96x128xf32> to vector<16x128xf32>
    %29 = vector.extract_strided_slice %13 {offsets = [0, 0], sizes = [16, 128], strides = [1, 1]} : vector<96x128xf32> to vector<16x128xf32>
    %30 = tpu.concatenate %25, %26, %27, %28, %29 in 1 : vector<16x128xf32>, vector<16x128xf32>, vector<16x128xf32>, vector<16x128xf32>, vector<16x128xf32> -> vector<16x640xf32>
    %cst_15 = arith.constant dense<0.000000e+00> : vector<8x640xf32>
    %31 = tpu.matmul %0, %30, %cst_15 {dimension_numbers = #tpu.dot_dimension_numbers<[1], [0], [0], [1], [0, 0, 1, 1], [], []>} : vector<8x16xf32>, vector<16x640xf32>, vector<8x640xf32> -> vector<8x640xf32>
    %32 = vector.extract_strided_slice %31 {offsets = [0, 0], sizes = [8, 128], strides = [1, 1]} : vector<8x640xf32> to vector<8x128xf32>
    %33 = vector.extract_strided_slice %31 {offsets = [0, 128], sizes = [8, 128], strides = [1, 1]} : vector<8x640xf32> to vector<8x128xf32>
    %34 = arith.mulf %32, %32 : vector<8x128xf32>
    %35 = arith.mulf %33, %33 : vector<8x128xf32>
    %36 = arith.mulf %32, %33 : vector<8x128xf32>
    %37 = vector.extract_strided_slice %31 {offsets = [0, 256], sizes = [8, 128], strides = [1, 1]} : vector<8x640xf32> to vector<8x128xf32>
    %38 = arith.subf %37, %34 : vector<8x128xf32>
    %39 = vector.extract_strided_slice %31 {offsets = [0, 384], sizes = [8, 128], strides = [1, 1]} : vector<8x640xf32> to vector<8x128xf32>
    %40 = arith.subf %39, %35 : vector<8x128xf32>
    %41 = vector.extract_strided_slice %31 {offsets = [0, 512], sizes = [8, 128], strides = [1, 1]} : vector<8x640xf32> to vector<8x128xf32>
    %42 = arith.subf %41, %36 : vector<8x128xf32>
    %cst_16 = arith.constant 2.000000e+00 : f32
    %43 = vector.broadcast %cst_16 : f32 to vector<8x128xf32>
    %44 = arith.mulf %43, %42 : vector<8x128xf32>
    %cst_17 = arith.constant 5.852250e+01 : f32
    %45 = vector.broadcast %cst_17 : f32 to vector<8x128xf32>
    %46 = arith.addf %44, %45 : vector<8x128xf32>
    %47 = arith.addf %38, %40 : vector<8x128xf32>
    %cst_18 = arith.constant 5.852250e+01 : f32
    %48 = vector.broadcast %cst_18 : f32 to vector<8x128xf32>
    %49 = arith.addf %47, %48 : vector<8x128xf32>
    %50 = arith.divf %46, %49 : vector<8x128xf32>
    %cst_19 = arith.constant 2.000000e+00 : f32
    %51 = vector.broadcast %cst_19 : f32 to vector<8x128xf32>
    %52 = arith.mulf %51, %36 : vector<8x128xf32>
    %cst_20 = arith.constant 6.502500e+00 : f32
    %53 = vector.broadcast %cst_20 : f32 to vector<8x128xf32>
    %54 = arith.addf %52, %53 : vector<8x128xf32>
    %55 = arith.addf %34, %35 : vector<8x128xf32>
    %cst_21 = arith.constant 6.502500e+00 : f32
    %56 = vector.broadcast %cst_21 : f32 to vector<8x128xf32>
    %57 = arith.addf %55, %56 : vector<8x128xf32>
    %58 = arith.divf %54, %57 : vector<8x128xf32>
    %59 = arith.mulf %58, %50 : vector<8x128xf32>
    %60 = arith.mulf %59, %22 : vector<8x128xf32>
    %61 = vector.shape_cast %60 : vector<8x128xf32> to vector<1x8x128xf32>
    %cst_22 = arith.constant dense<0.000000e+00> : vector<1xf32>
    %62 = vector.multi_reduction <add>, %61, %cst_22 [1, 2] : vector<1x8x128xf32> to vector<1xf32>
    %63 = vector.shape_cast %62 : vector<1xf32> to vector<1x1x1xf32>
    %64 = vector.extract %63[0, 0, 0] : f32 from vector<1x1x1xf32>
    %65 = vector.broadcast %64 : f32 to vector<1x1xf32>
    %cst_23 = arith.constant 0.027777778 : f32
    %66 = vector.broadcast %cst_23 : f32 to vector<1x1xf32>
    %67 = arith.mulf %65, %66 : vector<1x1xf32>
    %c0_i32 = arith.constant 0 : i32
    %68 = vector.broadcast %c0_i32 : i32 to vector<1x6xi32>
    %69 = arith.cmpi eq, %23, %68 : vector<1x6xi32>
    %cst_24 = arith.constant 0.000000e+00 : f32
    %70 = vector.shape_cast %67 : vector<1x1xf32> to vector<1x1xf32>
    %71 = vector.broadcast %70 : vector<1x1xf32> to vector<1x6xf32>
    %72 = vector.broadcast %cst_24 : f32 to vector<1x6xf32>
    %73 = arith.select %69, %71, %72 : vector<1x6xi1>, vector<1x6xf32>
    %74 = arith.addf %24, %73 : vector<1x6xf32>
    %75 = vector.extract_strided_slice %6 {offsets = [16, 0], sizes = [16, 128], strides = [1, 1]} : vector<96x128xf32> to vector<16x128xf32>
    %76 = vector.extract_strided_slice %7 {offsets = [16, 0], sizes = [16, 128], strides = [1, 1]} : vector<96x128xf32> to vector<16x128xf32>
    %77 = vector.extract_strided_slice %9 {offsets = [16, 0], sizes = [16, 128], strides = [1, 1]} : vector<96x128xf32> to vector<16x128xf32>
    %78 = vector.extract_strided_slice %11 {offsets = [16, 0], sizes = [16, 128], strides = [1, 1]} : vector<96x128xf32> to vector<16x128xf32>
    %79 = vector.extract_strided_slice %13 {offsets = [16, 0], sizes = [16, 128], strides = [1, 1]} : vector<96x128xf32> to vector<16x128xf32>
    %80 = tpu.concatenate %75, %76, %77, %78, %79 in 1 : vector<16x128xf32>, vector<16x128xf32>, vector<16x128xf32>, vector<16x128xf32>, vector<16x128xf32> -> vector<16x640xf32>
    %cst_25 = arith.constant dense<0.000000e+00> : vector<8x640xf32>
    %81 = tpu.matmul %0, %80, %cst_25 {dimension_numbers = #tpu.dot_dimension_numbers<[1], [0], [0], [1], [0, 0, 1, 1], [], []>} : vector<8x16xf32>, vector<16x640xf32>, vector<8x640xf32> -> vector<8x640xf32>
    %82 = vector.extract_strided_slice %81 {offsets = [0, 0], sizes = [8, 128], strides = [1, 1]} : vector<8x640xf32> to vector<8x128xf32>
    %83 = vector.extract_strided_slice %81 {offsets = [0, 128], sizes = [8, 128], strides = [1, 1]} : vector<8x640xf32> to vector<8x128xf32>
    %84 = arith.mulf %82, %82 : vector<8x128xf32>
    %85 = arith.mulf %83, %83 : vector<8x128xf32>
    %86 = arith.mulf %82, %83 : vector<8x128xf32>
    %87 = vector.extract_strided_slice %81 {offsets = [0, 256], sizes = [8, 128], strides = [1, 1]} : vector<8x640xf32> to vector<8x128xf32>
    %88 = arith.subf %87, %84 : vector<8x128xf32>
    %89 = vector.extract_strided_slice %81 {offsets = [0, 384], sizes = [8, 128], strides = [1, 1]} : vector<8x640xf32> to vector<8x128xf32>
    %90 = arith.subf %89, %85 : vector<8x128xf32>
    %91 = vector.extract_strided_slice %81 {offsets = [0, 512], sizes = [8, 128], strides = [1, 1]} : vector<8x640xf32> to vector<8x128xf32>
    %92 = arith.subf %91, %86 : vector<8x128xf32>
    %cst_26 = arith.constant 2.000000e+00 : f32
    %93 = vector.broadcast %cst_26 : f32 to vector<8x128xf32>
    %94 = arith.mulf %93, %92 : vector<8x128xf32>
    %cst_27 = arith.constant 5.852250e+01 : f32
    %95 = vector.broadcast %cst_27 : f32 to vector<8x128xf32>
    %96 = arith.addf %94, %95 : vector<8x128xf32>
    %97 = arith.addf %88, %90 : vector<8x128xf32>
    %cst_28 = arith.constant 5.852250e+01 : f32
    %98 = vector.broadcast %cst_28 : f32 to vector<8x128xf32>
    %99 = arith.addf %97, %98 : vector<8x128xf32>
    %100 = arith.divf %96, %99 : vector<8x128xf32>
    %cst_29 = arith.constant 2.000000e+00 : f32
    %101 = vector.broadcast %cst_29 : f32 to vector<8x128xf32>
    %102 = arith.mulf %101, %86 : vector<8x128xf32>
    %cst_30 = arith.constant 6.502500e+00 : f32
    %103 = vector.broadcast %cst_30 : f32 to vector<8x128xf32>
    %104 = arith.addf %102, %103 : vector<8x128xf32>
    %105 = arith.addf %84, %85 : vector<8x128xf32>
    %cst_31 = arith.constant 6.502500e+00 : f32
    %106 = vector.broadcast %cst_31 : f32 to vector<8x128xf32>
    %107 = arith.addf %105, %106 : vector<8x128xf32>
    %108 = arith.divf %104, %107 : vector<8x128xf32>
    %109 = arith.mulf %108, %100 : vector<8x128xf32>
    %110 = arith.mulf %109, %22 : vector<8x128xf32>
    %111 = vector.shape_cast %110 : vector<8x128xf32> to vector<1x8x128xf32>
    %cst_32 = arith.constant dense<0.000000e+00> : vector<1xf32>
    %112 = vector.multi_reduction <add>, %111, %cst_32 [1, 2] : vector<1x8x128xf32> to vector<1xf32>
    %113 = vector.shape_cast %112 : vector<1xf32> to vector<1x1x1xf32>
    %114 = vector.extract %113[0, 0, 0] : f32 from vector<1x1x1xf32>
    %115 = vector.broadcast %114 : f32 to vector<1x1xf32>
    %cst_33 = arith.constant 0.027777778 : f32
    %116 = vector.broadcast %cst_33 : f32 to vector<1x1xf32>
    %117 = arith.mulf %115, %116 : vector<1x1xf32>
    %c1_i32 = arith.constant 1 : i32
    %118 = vector.broadcast %c1_i32 : i32 to vector<1x6xi32>
    %119 = arith.cmpi eq, %23, %118 : vector<1x6xi32>
    %cst_34 = arith.constant 0.000000e+00 : f32
    %120 = vector.shape_cast %117 : vector<1x1xf32> to vector<1x1xf32>
    %121 = vector.broadcast %120 : vector<1x1xf32> to vector<1x6xf32>
    %122 = vector.broadcast %cst_34 : f32 to vector<1x6xf32>
    %123 = arith.select %119, %121, %122 : vector<1x6xi1>, vector<1x6xf32>
    %124 = arith.addf %74, %123 : vector<1x6xf32>
    %125 = vector.extract_strided_slice %6 {offsets = [32, 0], sizes = [16, 128], strides = [1, 1]} : vector<96x128xf32> to vector<16x128xf32>
    %126 = vector.extract_strided_slice %7 {offsets = [32, 0], sizes = [16, 128], strides = [1, 1]} : vector<96x128xf32> to vector<16x128xf32>
    %127 = vector.extract_strided_slice %9 {offsets = [32, 0], sizes = [16, 128], strides = [1, 1]} : vector<96x128xf32> to vector<16x128xf32>
    %128 = vector.extract_strided_slice %11 {offsets = [32, 0], sizes = [16, 128], strides = [1, 1]} : vector<96x128xf32> to vector<16x128xf32>
    %129 = vector.extract_strided_slice %13 {offsets = [32, 0], sizes = [16, 128], strides = [1, 1]} : vector<96x128xf32> to vector<16x128xf32>
    %130 = tpu.concatenate %125, %126, %127, %128, %129 in 1 : vector<16x128xf32>, vector<16x128xf32>, vector<16x128xf32>, vector<16x128xf32>, vector<16x128xf32> -> vector<16x640xf32>
    %cst_35 = arith.constant dense<0.000000e+00> : vector<8x640xf32>
    %131 = tpu.matmul %0, %130, %cst_35 {dimension_numbers = #tpu.dot_dimension_numbers<[1], [0], [0], [1], [0, 0, 1, 1], [], []>} : vector<8x16xf32>, vector<16x640xf32>, vector<8x640xf32> -> vector<8x640xf32>
    %132 = vector.extract_strided_slice %131 {offsets = [0, 0], sizes = [8, 128], strides = [1, 1]} : vector<8x640xf32> to vector<8x128xf32>
    %133 = vector.extract_strided_slice %131 {offsets = [0, 128], sizes = [8, 128], strides = [1, 1]} : vector<8x640xf32> to vector<8x128xf32>
    %134 = arith.mulf %132, %132 : vector<8x128xf32>
    %135 = arith.mulf %133, %133 : vector<8x128xf32>
    %136 = arith.mulf %132, %133 : vector<8x128xf32>
    %137 = vector.extract_strided_slice %131 {offsets = [0, 256], sizes = [8, 128], strides = [1, 1]} : vector<8x640xf32> to vector<8x128xf32>
    %138 = arith.subf %137, %134 : vector<8x128xf32>
    %139 = vector.extract_strided_slice %131 {offsets = [0, 384], sizes = [8, 128], strides = [1, 1]} : vector<8x640xf32> to vector<8x128xf32>
    %140 = arith.subf %139, %135 : vector<8x128xf32>
    %141 = vector.extract_strided_slice %131 {offsets = [0, 512], sizes = [8, 128], strides = [1, 1]} : vector<8x640xf32> to vector<8x128xf32>
    %142 = arith.subf %141, %136 : vector<8x128xf32>
    %cst_36 = arith.constant 2.000000e+00 : f32
    %143 = vector.broadcast %cst_36 : f32 to vector<8x128xf32>
    %144 = arith.mulf %143, %142 : vector<8x128xf32>
    %cst_37 = arith.constant 5.852250e+01 : f32
    %145 = vector.broadcast %cst_37 : f32 to vector<8x128xf32>
    %146 = arith.addf %144, %145 : vector<8x128xf32>
    %147 = arith.addf %138, %140 : vector<8x128xf32>
    %cst_38 = arith.constant 5.852250e+01 : f32
    %148 = vector.broadcast %cst_38 : f32 to vector<8x128xf32>
    %149 = arith.addf %147, %148 : vector<8x128xf32>
    %150 = arith.divf %146, %149 : vector<8x128xf32>
    %cst_39 = arith.constant 2.000000e+00 : f32
    %151 = vector.broadcast %cst_39 : f32 to vector<8x128xf32>
    %152 = arith.mulf %151, %136 : vector<8x128xf32>
    %cst_40 = arith.constant 6.502500e+00 : f32
    %153 = vector.broadcast %cst_40 : f32 to vector<8x128xf32>
    %154 = arith.addf %152, %153 : vector<8x128xf32>
    %155 = arith.addf %134, %135 : vector<8x128xf32>
    %cst_41 = arith.constant 6.502500e+00 : f32
    %156 = vector.broadcast %cst_41 : f32 to vector<8x128xf32>
    %157 = arith.addf %155, %156 : vector<8x128xf32>
    %158 = arith.divf %154, %157 : vector<8x128xf32>
    %159 = arith.mulf %158, %150 : vector<8x128xf32>
    %160 = arith.mulf %159, %22 : vector<8x128xf32>
    %161 = vector.shape_cast %160 : vector<8x128xf32> to vector<1x8x128xf32>
    %cst_42 = arith.constant dense<0.000000e+00> : vector<1xf32>
    %162 = vector.multi_reduction <add>, %161, %cst_42 [1, 2] : vector<1x8x128xf32> to vector<1xf32>
    %163 = vector.shape_cast %162 : vector<1xf32> to vector<1x1x1xf32>
    %164 = vector.extract %163[0, 0, 0] : f32 from vector<1x1x1xf32>
    %165 = vector.broadcast %164 : f32 to vector<1x1xf32>
    %cst_43 = arith.constant 0.027777778 : f32
    %166 = vector.broadcast %cst_43 : f32 to vector<1x1xf32>
    %167 = arith.mulf %165, %166 : vector<1x1xf32>
    %c2_i32 = arith.constant 2 : i32
    %168 = vector.broadcast %c2_i32 : i32 to vector<1x6xi32>
    %169 = arith.cmpi eq, %23, %168 : vector<1x6xi32>
    %cst_44 = arith.constant 0.000000e+00 : f32
    %170 = vector.shape_cast %167 : vector<1x1xf32> to vector<1x1xf32>
    %171 = vector.broadcast %170 : vector<1x1xf32> to vector<1x6xf32>
    %172 = vector.broadcast %cst_44 : f32 to vector<1x6xf32>
    %173 = arith.select %169, %171, %172 : vector<1x6xi1>, vector<1x6xf32>
    %174 = arith.addf %124, %173 : vector<1x6xf32>
    %175 = vector.extract_strided_slice %6 {offsets = [48, 0], sizes = [16, 128], strides = [1, 1]} : vector<96x128xf32> to vector<16x128xf32>
    %176 = vector.extract_strided_slice %7 {offsets = [48, 0], sizes = [16, 128], strides = [1, 1]} : vector<96x128xf32> to vector<16x128xf32>
    %177 = vector.extract_strided_slice %9 {offsets = [48, 0], sizes = [16, 128], strides = [1, 1]} : vector<96x128xf32> to vector<16x128xf32>
    %178 = vector.extract_strided_slice %11 {offsets = [48, 0], sizes = [16, 128], strides = [1, 1]} : vector<96x128xf32> to vector<16x128xf32>
    %179 = vector.extract_strided_slice %13 {offsets = [48, 0], sizes = [16, 128], strides = [1, 1]} : vector<96x128xf32> to vector<16x128xf32>
    %180 = tpu.concatenate %175, %176, %177, %178, %179 in 1 : vector<16x128xf32>, vector<16x128xf32>, vector<16x128xf32>, vector<16x128xf32>, vector<16x128xf32> -> vector<16x640xf32>
    %cst_45 = arith.constant dense<0.000000e+00> : vector<8x640xf32>
    %181 = tpu.matmul %0, %180, %cst_45 {dimension_numbers = #tpu.dot_dimension_numbers<[1], [0], [0], [1], [0, 0, 1, 1], [], []>} : vector<8x16xf32>, vector<16x640xf32>, vector<8x640xf32> -> vector<8x640xf32>
    %182 = vector.extract_strided_slice %181 {offsets = [0, 0], sizes = [8, 128], strides = [1, 1]} : vector<8x640xf32> to vector<8x128xf32>
    %183 = vector.extract_strided_slice %181 {offsets = [0, 128], sizes = [8, 128], strides = [1, 1]} : vector<8x640xf32> to vector<8x128xf32>
    %184 = arith.mulf %182, %182 : vector<8x128xf32>
    %185 = arith.mulf %183, %183 : vector<8x128xf32>
    %186 = arith.mulf %182, %183 : vector<8x128xf32>
    %187 = vector.extract_strided_slice %181 {offsets = [0, 256], sizes = [8, 128], strides = [1, 1]} : vector<8x640xf32> to vector<8x128xf32>
    %188 = arith.subf %187, %184 : vector<8x128xf32>
    %189 = vector.extract_strided_slice %181 {offsets = [0, 384], sizes = [8, 128], strides = [1, 1]} : vector<8x640xf32> to vector<8x128xf32>
    %190 = arith.subf %189, %185 : vector<8x128xf32>
    %191 = vector.extract_strided_slice %181 {offsets = [0, 512], sizes = [8, 128], strides = [1, 1]} : vector<8x640xf32> to vector<8x128xf32>
    %192 = arith.subf %191, %186 : vector<8x128xf32>
    %cst_46 = arith.constant 2.000000e+00 : f32
    %193 = vector.broadcast %cst_46 : f32 to vector<8x128xf32>
    %194 = arith.mulf %193, %192 : vector<8x128xf32>
    %cst_47 = arith.constant 5.852250e+01 : f32
    %195 = vector.broadcast %cst_47 : f32 to vector<8x128xf32>
    %196 = arith.addf %194, %195 : vector<8x128xf32>
    %197 = arith.addf %188, %190 : vector<8x128xf32>
    %cst_48 = arith.constant 5.852250e+01 : f32
    %198 = vector.broadcast %cst_48 : f32 to vector<8x128xf32>
    %199 = arith.addf %197, %198 : vector<8x128xf32>
    %200 = arith.divf %196, %199 : vector<8x128xf32>
    %cst_49 = arith.constant 2.000000e+00 : f32
    %201 = vector.broadcast %cst_49 : f32 to vector<8x128xf32>
    %202 = arith.mulf %201, %186 : vector<8x128xf32>
    %cst_50 = arith.constant 6.502500e+00 : f32
    %203 = vector.broadcast %cst_50 : f32 to vector<8x128xf32>
    %204 = arith.addf %202, %203 : vector<8x128xf32>
    %205 = arith.addf %184, %185 : vector<8x128xf32>
    %cst_51 = arith.constant 6.502500e+00 : f32
    %206 = vector.broadcast %cst_51 : f32 to vector<8x128xf32>
    %207 = arith.addf %205, %206 : vector<8x128xf32>
    %208 = arith.divf %204, %207 : vector<8x128xf32>
    %209 = arith.mulf %208, %200 : vector<8x128xf32>
    %210 = arith.mulf %209, %22 : vector<8x128xf32>
    %211 = vector.shape_cast %210 : vector<8x128xf32> to vector<1x8x128xf32>
    %cst_52 = arith.constant dense<0.000000e+00> : vector<1xf32>
    %212 = vector.multi_reduction <add>, %211, %cst_52 [1, 2] : vector<1x8x128xf32> to vector<1xf32>
    %213 = vector.shape_cast %212 : vector<1xf32> to vector<1x1x1xf32>
    %214 = vector.extract %213[0, 0, 0] : f32 from vector<1x1x1xf32>
    %215 = vector.broadcast %214 : f32 to vector<1x1xf32>
    %cst_53 = arith.constant 0.027777778 : f32
    %216 = vector.broadcast %cst_53 : f32 to vector<1x1xf32>
    %217 = arith.mulf %215, %216 : vector<1x1xf32>
    %c3_i32 = arith.constant 3 : i32
    %218 = vector.broadcast %c3_i32 : i32 to vector<1x6xi32>
    %219 = arith.cmpi eq, %23, %218 : vector<1x6xi32>
    %cst_54 = arith.constant 0.000000e+00 : f32
    %220 = vector.shape_cast %217 : vector<1x1xf32> to vector<1x1xf32>
    %221 = vector.broadcast %220 : vector<1x1xf32> to vector<1x6xf32>
    %222 = vector.broadcast %cst_54 : f32 to vector<1x6xf32>
    %223 = arith.select %219, %221, %222 : vector<1x6xi1>, vector<1x6xf32>
    %224 = arith.addf %174, %223 : vector<1x6xf32>
    %225 = vector.extract_strided_slice %6 {offsets = [64, 0], sizes = [16, 128], strides = [1, 1]} : vector<96x128xf32> to vector<16x128xf32>
    %226 = vector.extract_strided_slice %7 {offsets = [64, 0], sizes = [16, 128], strides = [1, 1]} : vector<96x128xf32> to vector<16x128xf32>
    %227 = vector.extract_strided_slice %9 {offsets = [64, 0], sizes = [16, 128], strides = [1, 1]} : vector<96x128xf32> to vector<16x128xf32>
    %228 = vector.extract_strided_slice %11 {offsets = [64, 0], sizes = [16, 128], strides = [1, 1]} : vector<96x128xf32> to vector<16x128xf32>
    %229 = vector.extract_strided_slice %13 {offsets = [64, 0], sizes = [16, 128], strides = [1, 1]} : vector<96x128xf32> to vector<16x128xf32>
    %230 = tpu.concatenate %225, %226, %227, %228, %229 in 1 : vector<16x128xf32>, vector<16x128xf32>, vector<16x128xf32>, vector<16x128xf32>, vector<16x128xf32> -> vector<16x640xf32>
    %cst_55 = arith.constant dense<0.000000e+00> : vector<8x640xf32>
    %231 = tpu.matmul %0, %230, %cst_55 {dimension_numbers = #tpu.dot_dimension_numbers<[1], [0], [0], [1], [0, 0, 1, 1], [], []>} : vector<8x16xf32>, vector<16x640xf32>, vector<8x640xf32> -> vector<8x640xf32>
    %232 = vector.extract_strided_slice %231 {offsets = [0, 0], sizes = [8, 128], strides = [1, 1]} : vector<8x640xf32> to vector<8x128xf32>
    %233 = vector.extract_strided_slice %231 {offsets = [0, 128], sizes = [8, 128], strides = [1, 1]} : vector<8x640xf32> to vector<8x128xf32>
    %234 = arith.mulf %232, %232 : vector<8x128xf32>
    %235 = arith.mulf %233, %233 : vector<8x128xf32>
    %236 = arith.mulf %232, %233 : vector<8x128xf32>
    %237 = vector.extract_strided_slice %231 {offsets = [0, 256], sizes = [8, 128], strides = [1, 1]} : vector<8x640xf32> to vector<8x128xf32>
    %238 = arith.subf %237, %234 : vector<8x128xf32>
    %239 = vector.extract_strided_slice %231 {offsets = [0, 384], sizes = [8, 128], strides = [1, 1]} : vector<8x640xf32> to vector<8x128xf32>
    %240 = arith.subf %239, %235 : vector<8x128xf32>
    %241 = vector.extract_strided_slice %231 {offsets = [0, 512], sizes = [8, 128], strides = [1, 1]} : vector<8x640xf32> to vector<8x128xf32>
    %242 = arith.subf %241, %236 : vector<8x128xf32>
    %cst_56 = arith.constant 2.000000e+00 : f32
    %243 = vector.broadcast %cst_56 : f32 to vector<8x128xf32>
    %244 = arith.mulf %243, %242 : vector<8x128xf32>
    %cst_57 = arith.constant 5.852250e+01 : f32
    %245 = vector.broadcast %cst_57 : f32 to vector<8x128xf32>
    %246 = arith.addf %244, %245 : vector<8x128xf32>
    %247 = arith.addf %238, %240 : vector<8x128xf32>
    %cst_58 = arith.constant 5.852250e+01 : f32
    %248 = vector.broadcast %cst_58 : f32 to vector<8x128xf32>
    %249 = arith.addf %247, %248 : vector<8x128xf32>
    %250 = arith.divf %246, %249 : vector<8x128xf32>
    %cst_59 = arith.constant 2.000000e+00 : f32
    %251 = vector.broadcast %cst_59 : f32 to vector<8x128xf32>
    %252 = arith.mulf %251, %236 : vector<8x128xf32>
    %cst_60 = arith.constant 6.502500e+00 : f32
    %253 = vector.broadcast %cst_60 : f32 to vector<8x128xf32>
    %254 = arith.addf %252, %253 : vector<8x128xf32>
    %255 = arith.addf %234, %235 : vector<8x128xf32>
    %cst_61 = arith.constant 6.502500e+00 : f32
    %256 = vector.broadcast %cst_61 : f32 to vector<8x128xf32>
    %257 = arith.addf %255, %256 : vector<8x128xf32>
    %258 = arith.divf %254, %257 : vector<8x128xf32>
    %259 = arith.mulf %258, %250 : vector<8x128xf32>
    %260 = arith.mulf %259, %22 : vector<8x128xf32>
    %261 = vector.shape_cast %260 : vector<8x128xf32> to vector<1x8x128xf32>
    %cst_62 = arith.constant dense<0.000000e+00> : vector<1xf32>
    %262 = vector.multi_reduction <add>, %261, %cst_62 [1, 2] : vector<1x8x128xf32> to vector<1xf32>
    %263 = vector.shape_cast %262 : vector<1xf32> to vector<1x1x1xf32>
    %264 = vector.extract %263[0, 0, 0] : f32 from vector<1x1x1xf32>
    %265 = vector.broadcast %264 : f32 to vector<1x1xf32>
    %cst_63 = arith.constant 0.027777778 : f32
    %266 = vector.broadcast %cst_63 : f32 to vector<1x1xf32>
    %267 = arith.mulf %265, %266 : vector<1x1xf32>
    %c4_i32 = arith.constant 4 : i32
    %268 = vector.broadcast %c4_i32 : i32 to vector<1x6xi32>
    %269 = arith.cmpi eq, %23, %268 : vector<1x6xi32>
    %cst_64 = arith.constant 0.000000e+00 : f32
    %270 = vector.shape_cast %267 : vector<1x1xf32> to vector<1x1xf32>
    %271 = vector.broadcast %270 : vector<1x1xf32> to vector<1x6xf32>
    %272 = vector.broadcast %cst_64 : f32 to vector<1x6xf32>
    %273 = arith.select %269, %271, %272 : vector<1x6xi1>, vector<1x6xf32>
    %274 = arith.addf %224, %273 : vector<1x6xf32>
    %275 = vector.extract_strided_slice %6 {offsets = [80, 0], sizes = [16, 128], strides = [1, 1]} : vector<96x128xf32> to vector<16x128xf32>
    %276 = vector.extract_strided_slice %7 {offsets = [80, 0], sizes = [16, 128], strides = [1, 1]} : vector<96x128xf32> to vector<16x128xf32>
    %277 = vector.extract_strided_slice %9 {offsets = [80, 0], sizes = [16, 128], strides = [1, 1]} : vector<96x128xf32> to vector<16x128xf32>
    %278 = vector.extract_strided_slice %11 {offsets = [80, 0], sizes = [16, 128], strides = [1, 1]} : vector<96x128xf32> to vector<16x128xf32>
    %279 = vector.extract_strided_slice %13 {offsets = [80, 0], sizes = [16, 128], strides = [1, 1]} : vector<96x128xf32> to vector<16x128xf32>
    %280 = tpu.concatenate %275, %276, %277, %278, %279 in 1 : vector<16x128xf32>, vector<16x128xf32>, vector<16x128xf32>, vector<16x128xf32>, vector<16x128xf32> -> vector<16x640xf32>
    %cst_65 = arith.constant dense<0.000000e+00> : vector<8x640xf32>
    %281 = tpu.matmul %0, %280, %cst_65 {dimension_numbers = #tpu.dot_dimension_numbers<[1], [0], [0], [1], [0, 0, 1, 1], [], []>} : vector<8x16xf32>, vector<16x640xf32>, vector<8x640xf32> -> vector<8x640xf32>
    %282 = vector.extract_strided_slice %281 {offsets = [0, 0], sizes = [8, 128], strides = [1, 1]} : vector<8x640xf32> to vector<8x128xf32>
    %283 = vector.extract_strided_slice %281 {offsets = [0, 128], sizes = [8, 128], strides = [1, 1]} : vector<8x640xf32> to vector<8x128xf32>
    %284 = arith.mulf %282, %282 : vector<8x128xf32>
    %285 = arith.mulf %283, %283 : vector<8x128xf32>
    %286 = arith.mulf %282, %283 : vector<8x128xf32>
    %287 = vector.extract_strided_slice %281 {offsets = [0, 256], sizes = [8, 128], strides = [1, 1]} : vector<8x640xf32> to vector<8x128xf32>
    %288 = arith.subf %287, %284 : vector<8x128xf32>
    %289 = vector.extract_strided_slice %281 {offsets = [0, 384], sizes = [8, 128], strides = [1, 1]} : vector<8x640xf32> to vector<8x128xf32>
    %290 = arith.subf %289, %285 : vector<8x128xf32>
    %291 = vector.extract_strided_slice %281 {offsets = [0, 512], sizes = [8, 128], strides = [1, 1]} : vector<8x640xf32> to vector<8x128xf32>
    %292 = arith.subf %291, %286 : vector<8x128xf32>
    %cst_66 = arith.constant 2.000000e+00 : f32
    %293 = vector.broadcast %cst_66 : f32 to vector<8x128xf32>
    %294 = arith.mulf %293, %292 : vector<8x128xf32>
    %cst_67 = arith.constant 5.852250e+01 : f32
    %295 = vector.broadcast %cst_67 : f32 to vector<8x128xf32>
    %296 = arith.addf %294, %295 : vector<8x128xf32>
    %297 = arith.addf %288, %290 : vector<8x128xf32>
    %cst_68 = arith.constant 5.852250e+01 : f32
    %298 = vector.broadcast %cst_68 : f32 to vector<8x128xf32>
    %299 = arith.addf %297, %298 : vector<8x128xf32>
    %300 = arith.divf %296, %299 : vector<8x128xf32>
    %cst_69 = arith.constant 2.000000e+00 : f32
    %301 = vector.broadcast %cst_69 : f32 to vector<8x128xf32>
    %302 = arith.mulf %301, %286 : vector<8x128xf32>
    %cst_70 = arith.constant 6.502500e+00 : f32
    %303 = vector.broadcast %cst_70 : f32 to vector<8x128xf32>
    %304 = arith.addf %302, %303 : vector<8x128xf32>
    %305 = arith.addf %284, %285 : vector<8x128xf32>
    %cst_71 = arith.constant 6.502500e+00 : f32
    %306 = vector.broadcast %cst_71 : f32 to vector<8x128xf32>
    %307 = arith.addf %305, %306 : vector<8x128xf32>
    %308 = arith.divf %304, %307 : vector<8x128xf32>
    %309 = arith.mulf %308, %300 : vector<8x128xf32>
    %310 = arith.mulf %309, %22 : vector<8x128xf32>
    %311 = vector.shape_cast %310 : vector<8x128xf32> to vector<1x8x128xf32>
    %cst_72 = arith.constant dense<0.000000e+00> : vector<1xf32>
    %312 = vector.multi_reduction <add>, %311, %cst_72 [1, 2] : vector<1x8x128xf32> to vector<1xf32>
    %313 = vector.shape_cast %312 : vector<1xf32> to vector<1x1x1xf32>
    %314 = vector.extract %313[0, 0, 0] : f32 from vector<1x1x1xf32>
    %315 = vector.broadcast %314 : f32 to vector<1x1xf32>
    %cst_73 = arith.constant 0.027777778 : f32
    %316 = vector.broadcast %cst_73 : f32 to vector<1x1xf32>
    %317 = arith.mulf %315, %316 : vector<1x1xf32>
    %c5_i32 = arith.constant 5 : i32
    %318 = vector.broadcast %c5_i32 : i32 to vector<1x6xi32>
    %319 = arith.cmpi eq, %23, %318 : vector<1x6xi32>
    %cst_74 = arith.constant 0.000000e+00 : f32
    %320 = vector.shape_cast %317 : vector<1x1xf32> to vector<1x1xf32>
    %321 = vector.broadcast %320 : vector<1x1xf32> to vector<1x6xf32>
    %322 = vector.broadcast %cst_74 : f32 to vector<1x6xf32>
    %323 = arith.select %319, %321, %322 : vector<1x6xi1>, vector<1x6xf32>
    %324 = arith.addf %274, %323 : vector<1x6xf32>
    %c0_75 = arith.constant 0 : index
    %c0_76 = arith.constant 0 : index
    %c0_77 = arith.constant 0 : index
    %325 = vector.load %arg5[%c0_75, %c0_76, %c0_77] : memref<1x1x6xf32, #tpu.memory_space<vmem>>, vector<1x1x6xf32>
    %326 = vector.shape_cast %325 : vector<1x1x6xf32> to vector<1x6xf32>
    %327 = vector.shape_cast %324 : vector<1x6xf32> to vector<1x1x6xf32>
    tpu.vector_store %arg5[%c0_75, %c0_76, %c0_77], %327 {strides = array<i32>} : memref<1x1x6xf32, #tpu.memory_space<vmem>>, vector<1x1x6xf32>,
    return
  }
  func.func @transform_0(%arg0: i32) -> (i32, i32, i32) {
    %c0_i32 = arith.constant 0 : i32
    %c0_i32_0 = arith.constant 0 : i32
    %c0_i32_1 = arith.constant 0 : i32
    return %arg0, %c0_i32, %c0_i32_0 : i32, i32, i32
  }
  func.func @transform_1(%arg0: i32) -> (i32, i32, i32) {
    %c0_i32 = arith.constant 0 : i32
    %c0_i32_0 = arith.constant 0 : i32
    %c0_i32_1 = arith.constant 0 : i32
    return %arg0, %c0_i32, %c0_i32_0 : i32, i32, i32
  }
  func.func @transform_2(%arg0: i32) -> (i32, i32) {
    %c0_i32 = arith.constant 0 : i32
    %c0_i32_0 = arith.constant 0 : i32
    %c0_i32_1 = arith.constant 0 : i32
    return %c0_i32, %c0_i32_0 : i32, i32
  }
  func.func @transform_3(%arg0: i32) -> (i32, i32) {
    %c0_i32 = arith.constant 0 : i32
    %c0_i32_0 = arith.constant 0 : i32
    %c0_i32_1 = arith.constant 0 : i32
    return %c0_i32, %c0_i32_0 : i32, i32
  }
  func.func @transform_4(%arg0: i32) -> (i32, i32, i32) {
    %c0_i32 = arith.constant 0 : i32
    %c0_i32_0 = arith.constant 0 : i32
    %c0_i32_1 = arith.constant 0 : i32
    return %arg0, %c0_i32, %c0_i32_0 : i32, i32, i32
  }
}

</mosaic_0001>

<llo_original>
// kernel: tpu_custom_call.1
$region0: #{tpu_custom_call.1}
  #allocation0 [shape = 'u32[]', space=smem, size = 0x4, offset = 0x4, fixed_abs, tag = 'smem constant byte address 0x4 - core index']
  #allocation1 [shape = 'u32[144,128]{1,0:T(1,128)}', space=vmem, size = 0x12000, scoped, tag = 'internal scratch']
  %s0 = inlined_call_operand.vmem [shape: f32[1,96,16], index: 0, kind: input, shape index: {}]
  %s1 = inlined_call_operand.vmem [shape: f32[1,96,16], index: 1, kind: input, shape index: {}]
  %s2 = inlined_call_operand.vmem [shape: f32[8,16], index: 2, kind: input, shape index: {}]
  %s3 = inlined_call_operand.vmem [shape: f32[16,128], index: 3, kind: input, shape index: {}]
  %s4 = inlined_call_operand.hbm [shape: f32[1,1,6], index: 4, kind: output, shape index: {}]
  %s5 = sld [smem:[#allocation0]]
  $region26: #{tpu_custom_call.1} parent=0
    _
  %s7 = ssub.s32 1, %s5
  %s8 = scalar_select 0, %s7, %s5
  $region1: #{tpu_custom_call.1} parent=0
    #allocation2 [shape = 'u8[512]{0}', space=vmem, size = 0x400, scoped, tag = 'output window, operand 0, single buffered']
    #allocation3 [shape = 's32[1]{0}', space=sflag, size = 0x4, scoped, tag = 'scoped memory for tpu_custom_call.1']
    %9 = vsyncpa [#allocation3], 0
    // Predicated region
    $region2: #{tpu_custom_call.1} parent=1 // pred_check
      _
    $region3: #{tpu_custom_call.1} parent=1 // pred_check_branch
      %11 = sbr.rel (0) target = $region5
    $region4: #{tpu_custom_call.1} parent=1 // pred_region
      _
    $region5: #{tpu_custom_call.1} parent=1 // pred_fallthru
      _
    // Predicated region
    $region6: #{tpu_custom_call.1} parent=1 // pred_check
      _
    $region7: #{tpu_custom_call.1} parent=1 // pred_check_branch
      %13 = sbr.rel (0) target = $region9
    $region8: #{tpu_custom_call.1} parent=1 // pred_region
      _
    $region9: #{tpu_custom_call.1} parent=1 // pred_fallthru
      _
    // Predicated region
    $region10: #{tpu_custom_call.1} parent=1 // pred_check
      _
    $region11: #{tpu_custom_call.1} parent=1 // pred_check_branch
      %15 = sbr.rel (0) target = $region13
    $region12: #{tpu_custom_call.1} parent=1 // pred_region
      _
    $region13: #{tpu_custom_call.1} parent=1 // pred_fallthru
      _
    // Predicated region
    $region14: #{tpu_custom_call.1} parent=1 // pred_check
      _
    $region15: #{tpu_custom_call.1} parent=1 // pred_check_branch
      %17 = sbr.rel (0) target = $region17
    $region16: #{tpu_custom_call.1} parent=1 // pred_region
      _
    $region17: #{tpu_custom_call.1} parent=1 // pred_fallthru
      _
    %v18 = vld [vmem:[%s2] sm:$0xff]
    %v19 = vld [vmem:[%s3] sm:$0xff]
    %v20 = vld [vmem:[%s3 + $0x8] sm:$0xff]
    %v21 = vld [vmem:[%s0] sm:$0xff]
    %v22 = vld [vmem:[%s0 + $0x8] sm:$0xff]
    %v23 = vld [vmem:[%s0 + $0x10] sm:$0xff]
    %v24 = vld [vmem:[%s0 + $0x18] sm:$0xff]
    %v25 = vld [vmem:[%s0 + $0x20] sm:$0xff]
    %v26 = vld [vmem:[%s0 + $0x28] sm:$0xff]
    %v27 = vld [vmem:[%s0 + $0x30] sm:$0xff]
    %v28 = vld [vmem:[%s0 + $0x38] sm:$0xff]
    %v29 = vld [vmem:[%s0 + $0x40] sm:$0xff]
    %v30 = vld [vmem:[%s0 + $0x48] sm:$0xff]
    %v31 = vld [vmem:[%s0 + $0x50] sm:$0xff]
    %v32 = vld [vmem:[%s0 + $0x58] sm:$0xff]
    %v33 = vld [vmem:[%s1] sm:$0xff]
    %v34 = vld [vmem:[%s1 + $0x8] sm:$0xff]
    %v35 = vld [vmem:[%s1 + $0x10] sm:$0xff]
    %v36 = vld [vmem:[%s1 + $0x18] sm:$0xff]
    %v37 = vld [vmem:[%s1 + $0x20] sm:$0xff]
    %v38 = vld [vmem:[%s1 + $0x28] sm:$0xff]
    %v39 = vld [vmem:[%s1 + $0x30] sm:$0xff]
    %v40 = vld [vmem:[%s1 + $0x38] sm:$0xff]
    %v41 = vld [vmem:[%s1 + $0x40] sm:$0xff]
    %v42 = vld [vmem:[%s1 + $0x48] sm:$0xff]
    %v43 = vld [vmem:[%s1 + $0x50] sm:$0xff]
    %v44 = vld [vmem:[%s1 + $0x58] sm:$0xff]
    %vm45 = vcmask 130048
    %v47 = vsel %vm45, %v21, 0
    %v50 = vsel %vm45, %v22, 0
    %v53 = vsel %vm45, %v23, 0
    %v56 = vsel %vm45, %v24, 0
    %v59 = vsel %vm45, %v25, 0
    %v62 = vsel %vm45, %v26, 0
    %v65 = vsel %vm45, %v27, 0
    %v68 = vsel %vm45, %v28, 0
    %v71 = vsel %vm45, %v29, 0
    %v74 = vsel %vm45, %v30, 0
    %v77 = vsel %vm45, %v31, 0
    %v80 = vsel %vm45, %v32, 0
    %82 = vmatprep.subr.mxu0 0.0
    %83 = vmatpush1.msra.mxu0 %v19
    %84 = vmatprep.subr.mxu0 0.0
    %85 = vmatpush1.msra.mxu0 %v20
    %86 = vmatprep.subr.mxu0 0.0
    %87 = vmatpush1.msra.mxu0 0.0
    %88 = vmatprep.subr.mxu0 0.0
    %89 = vmatpush1.msra.mxu0 0.0
    %90 = vmatprep.subr.mxu0 0.0
    %91 = vmatpush1.msra.mxu0 0.0
    %92 = vmatprep.subr.mxu0 0.0
    %93 = vmatpush1.msra.mxu0 0.0
    %94 = vmatprep.subr.mxu0 0.0
    %95 = vmatpush1.msra.mxu0 0.0
    %96 = vmatprep.subr.mxu0 0.0
    %97 = vmatpush1.msra.mxu0 0.0
    %98 = vmatprep.subr.mxu0 0.0
    %99 = vmatpush1.msra.mxu0 0.0
    %100 = vmatprep.subr.mxu0 0.0
    %101 = vmatpush1.msra.mxu0 0.0
    %102 = vmatprep.subr.mxu0 0.0
    %103 = vmatpush1.msra.mxu0 0.0
    %104 = vmatprep.subr.mxu0 0.0
    %105 = vmatpush1.msra.mxu0 0.0
    %106 = vmatprep.subr.mxu0 0.0
    %107 = vmatpush1.msra.mxu0 0.0
    %108 = vmatprep.subr.mxu0 0.0
    %109 = vmatpush1.msra.mxu0 0.0
    %110 = vmatprep.subr.mxu0 0.0
    %111 = vmatpush1.msra.mxu0 0.0
    %112 = vmatprep.subr.mxu0 0.0
    %113 = vmatpush1.msra.mxu0 0.0
    %114 = vmatprep.subr.mxu0 0.0
    %115 = vmatpush1.msra.mxu0 0.0
    %116 = vmatprep.subr.mxu0 0.0
    %117 = vmatpush1.msra.mxu0 0.0
    %118 = vmatprep.subr.mxu0 0.0
    %119 = vmatpush1.msra.mxu0 0.0
    %120 = vmatprep.subr.mxu0 0.0
    %121 = vmatpush1.msra.mxu0 0.0
    %122 = vmatprep.subr.mxu0 0.0
    %123 = vmatpush1.msra.mxu0 0.0
    %124 = vmatprep.subr.mxu0 0.0
    %125 = vmatpush1.msra.mxu0 0.0
    %126 = vmatprep.subr.mxu0 0.0
    %127 = vmatpush1.msra.mxu0 0.0
    %128 = vmatprep.subr.mxu0 0.0
    %129 = vmatpush1.msra.mxu0 0.0
    %130 = vmatprep.subr.mxu0 0.0
    %131 = vmatpush1.msra.mxu0 0.0
    %132 = vmatprep.subr.mxu0 0.0
    %133 = vmatpush1.msra.mxu0 0.0
    %134 = vmatprep.subr.mxu0 0.0
    %135 = vmatpush1.msra.mxu0 0.0
    %136 = vmatprep.subr.mxu0 0.0
    %137 = vmatpush1.msra.mxu0 0.0
    %138 = vmatprep.subr.mxu0 0.0
    %139 = vmatpush1.msra.mxu0 0.0
    %140 = vmatprep.subr.mxu0 0.0
    %141 = vmatpush1.msra.mxu0 0.0
    %142 = vmatprep.subr.mxu0 0.0
    %143 = vmatpush1.msra.mxu0 0.0
    %144 = vmatprep.subr.mxu0 0.0
    %145 = vmatpush1.msra.mxu0 0.0
    %146 = vmatprep.mubr.f32.mxu0 0.0
    %147 = vmatmul.mubr.f32.gmra.mrb[0].mxu0 %v47
    %v148 = vpop.f32.mrb[0].mxu0
    %v149 = vadd.f32 0.0, %v148
    %v150 = vpop.f32.mrb[0].mxu0
    %151 = vmatprep.mubr.f32.mxu0 0.0
    %152 = vmatmul.mubr.f32.gmra.mrb[0].mxu0 %v50
    %v153 = vpop.f32.mrb[0].mxu0
    %v154 = vadd.f32 0.0, %v153
    %v155 = vpop.f32.mrb[0].mxu0
    %156 = vmatprep.mubr.f32.mxu0 0.0
    %157 = vmatmul.mubr.f32.gmra.mrb[0].mxu0 %v53
    %v158 = vpop.f32.mrb[0].mxu0
    %v159 = vadd.f32 0.0, %v158
    %v160 = vpop.f32.mrb[0].mxu0
    %161 = vmatprep.mubr.f32.mxu0 0.0
    %162 = vmatmul.mubr.f32.gmra.mrb[0].mxu0 %v56
    %v163 = vpop.f32.mrb[0].mxu0
    %v164 = vadd.f32 0.0, %v163
    %v165 = vpop.f32.mrb[0].mxu0
    %166 = vmatprep.mubr.f32.mxu0 0.0
    %167 = vmatmul.mubr.f32.gmra.mrb[0].mxu0 %v59
    %v168 = vpop.f32.mrb[0].mxu0
    %v169 = vadd.f32 0.0, %v168
    %v170 = vpop.f32.mrb[0].mxu0
    %171 = vmatprep.mubr.f32.mxu0 0.0
    %172 = vmatmul.mubr.f32.gmra.mrb[0].mxu0 %v62
    %v173 = vpop.f32.mrb[0].mxu0
    %v174 = vadd.f32 0.0, %v173
    %v175 = vpop.f32.mrb[0].mxu0
    %176 = vmatprep.mubr.f32.mxu0 0.0
    %177 = vmatmul.mubr.f32.gmra.mrb[0].mxu0 %v65
    %v178 = vpop.f32.mrb[0].mxu0
    %v179 = vadd.f32 0.0, %v178
    %v180 = vpop.f32.mrb[0].mxu0
    %181 = vmatprep.mubr.f32.mxu0 0.0
    %182 = vmatmul.mubr.f32.gmra.mrb[0].mxu0 %v68
    %v183 = vpop.f32.mrb[0].mxu0
    %v184 = vadd.f32 0.0, %v183
    %v185 = vpop.f32.mrb[0].mxu0
    %186 = vmatprep.mubr.f32.mxu0 0.0
    %187 = vmatmul.mubr.f32.gmra.mrb[0].mxu0 %v71
    %v188 = vpop.f32.mrb[0].mxu0
    %v189 = vadd.f32 0.0, %v188
    %v190 = vpop.f32.mrb[0].mxu0
    %191 = vmatprep.mubr.f32.mxu0 0.0
    %192 = vmatmul.mubr.f32.gmra.mrb[0].mxu0 %v74
    %v193 = vpop.f32.mrb[0].mxu0
    %v194 = vadd.f32 0.0, %v193
    %v195 = vpop.f32.mrb[0].mxu0
    %196 = vmatprep.mubr.f32.mxu0 0.0
    %197 = vmatmul.mubr.f32.gmra.mrb[0].mxu0 %v77
    %v198 = vpop.f32.mrb[0].mxu0
    %v199 = vadd.f32 0.0, %v198
    %v200 = vpop.f32.mrb[0].mxu0
    %201 = vmatprep.mubr.f32.mxu0 0.0
    %202 = vmatmul.mubr.f32.gmra.mrb[0].mxu0 %v80
    %v203 = vpop.f32.mrb[0].mxu0
    %v204 = vadd.f32 0.0, %v203
    %v205 = vpop.f32.mrb[0].mxu0
    %206 = vdwg.mxu0
    %v208 = vsel %vm45, %v33, 0
    %v211 = vsel %vm45, %v34, 0
    %v214 = vsel %vm45, %v35, 0
    %v217 = vsel %vm45, %v36, 0
    %v220 = vsel %vm45, %v37, 0
    %v223 = vsel %vm45, %v38, 0
    %v226 = vsel %vm45, %v39, 0
    %v229 = vsel %vm45, %v40, 0
    %v232 = vsel %vm45, %v41, 0
    %v235 = vsel %vm45, %v42, 0
    %v238 = vsel %vm45, %v43, 0
    %v241 = vsel %vm45, %v44, 0
    %243 = vmatprep.subr.mxu0 0.0
    %244 = vmatpush1.msra.mxu0 %v19
    %245 = vmatprep.subr.mxu0 0.0
    %246 = vmatpush1.msra.mxu0 %v20
    %247 = vmatprep.subr.mxu0 0.0
    %248 = vmatpush1.msra.mxu0 0.0
    %249 = vmatprep.subr.mxu0 0.0
    %250 = vmatpush1.msra.mxu0 0.0
    %251 = vmatprep.subr.mxu0 0.0
    %252 = vmatpush1.msra.mxu0 0.0
    %253 = vmatprep.subr.mxu0 0.0
    %254 = vmatpush1.msra.mxu0 0.0
    %255 = vmatprep.subr.mxu0 0.0
    %256 = vmatpush1.msra.mxu0 0.0
    %257 = vmatprep.subr.mxu0 0.0
    %258 = vmatpush1.msra.mxu0 0.0
    %259 = vmatprep.subr.mxu0 0.0
    %260 = vmatpush1.msra.mxu0 0.0
    %261 = vmatprep.subr.mxu0 0.0
    %262 = vmatpush1.msra.mxu0 0.0
    %263 = vmatprep.subr.mxu0 0.0
    %264 = vmatpush1.msra.mxu0 0.0
    %265 = vmatprep.subr.mxu0 0.0
    %266 = vmatpush1.msra.mxu0 0.0
    %267 = vmatprep.subr.mxu0 0.0
    %268 = vmatpush1.msra.mxu0 0.0
    %269 = vmatprep.subr.mxu0 0.0
    %270 = vmatpush1.msra.mxu0 0.0
    %271 = vmatprep.subr.mxu0 0.0
    %272 = vmatpush1.msra.mxu0 0.0
    %273 = vmatprep.subr.mxu0 0.0
    %274 = vmatpush1.msra.mxu0 0.0
    %275 = vmatprep.subr.mxu0 0.0
    %276 = vmatpush1.msra.mxu0 0.0
    %277 = vmatprep.subr.mxu0 0.0
    %278 = vmatpush1.msra.mxu0 0.0
    %279 = vmatprep.subr.mxu0 0.0
    %280 = vmatpush1.msra.mxu0 0.0
    %281 = vmatprep.subr.mxu0 0.0
    %282 = vmatpush1.msra.mxu0 0.0
    %283 = vmatprep.subr.mxu0 0.0
    %284 = vmatpush1.msra.mxu0 0.0
    %285 = vmatprep.subr.mxu0 0.0
    %286 = vmatpush1.msra.mxu0 0.0
    %287 = vmatprep.subr.mxu0 0.0
    %288 = vmatpush1.msra.mxu0 0.0
    %289 = vmatprep.subr.mxu0 0.0
    %290 = vmatpush1.msra.mxu0 0.0
    %291 = vmatprep.subr.mxu0 0.0
    %292 = vmatpush1.msra.mxu0 0.0
    %293 = vmatprep.subr.mxu0 0.0
    %294 = vmatpush1.msra.mxu0 0.0
    %295 = vmatprep.subr.mxu0 0.0
    %296 = vmatpush1.msra.mxu0 0.0
    %297 = vmatprep.subr.mxu0 0.0
    %298 = vmatpush1.msra.mxu0 0.0
    %299 = vmatprep.subr.mxu0 0.0
    %300 = vmatpush1.msra.mxu0 0.0
    %301 = vmatprep.subr.mxu0 0.0
    %302 = vmatpush1.msra.mxu0 0.0
    %303 = vmatprep.subr.mxu0 0.0
    %304 = vmatpush1.msra.mxu0 0.0
    %305 = vmatprep.subr.mxu0 0.0
    %306 = vmatpush1.msra.mxu0 0.0
    %307 = vmatprep.mubr.f32.mxu0 0.0
    %308 = vmatmul.mubr.f32.gmra.mrb[0].mxu0 %v208
    %v309 = vpop.f32.mrb[0].mxu0
    %v310 = vadd.f32 0.0, %v309
    %v311 = vpop.f32.mrb[0].mxu0
    %312 = vmatprep.mubr.f32.mxu0 0.0
    %313 = vmatmul.mubr.f32.gmra.mrb[0].mxu0 %v211
    %v314 = vpop.f32.mrb[0].mxu0
    %v315 = vadd.f32 0.0, %v314
    %v316 = vpop.f32.mrb[0].mxu0
    %317 = vmatprep.mubr.f32.mxu0 0.0
    %318 = vmatmul.mubr.f32.gmra.mrb[0].mxu0 %v214
    %v319 = vpop.f32.mrb[0].mxu0
    %v320 = vadd.f32 0.0, %v319
    %v321 = vpop.f32.mrb[0].mxu0
    %322 = vmatprep.mubr.f32.mxu0 0.0
    %323 = vmatmul.mubr.f32.gmra.mrb[0].mxu0 %v217
    %v324 = vpop.f32.mrb[0].mxu0
    %v325 = vadd.f32 0.0, %v324
    %v326 = vpop.f32.mrb[0].mxu0
    %327 = vmatprep.mubr.f32.mxu0 0.0
    %328 = vmatmul.mubr.f32.gmra.mrb[0].mxu0 %v220
    %v329 = vpop.f32.mrb[0].mxu0
    %v330 = vadd.f32 0.0, %v329
    %v331 = vpop.f32.mrb[0].mxu0
    %332 = vmatprep.mubr.f32.mxu0 0.0
    %333 = vmatmul.mubr.f32.gmra.mrb[0].mxu0 %v223
    %v334 = vpop.f32.mrb[0].mxu0
    %v335 = vadd.f32 0.0, %v334
    %v336 = vpop.f32.mrb[0].mxu0
    %337 = vmatprep.mubr.f32.mxu0 0.0
    %338 = vmatmul.mubr.f32.gmra.mrb[0].mxu0 %v226
    %v339 = vpop.f32.mrb[0].mxu0
    %v340 = vadd.f32 0.0, %v339
    %v341 = vpop.f32.mrb[0].mxu0
    %342 = vmatprep.mubr.f32.mxu0 0.0
    %343 = vmatmul.mubr.f32.gmra.mrb[0].mxu0 %v229
    %v344 = vpop.f32.mrb[0].mxu0
    %v345 = vadd.f32 0.0, %v344
    %v346 = vpop.f32.mrb[0].mxu0
    %347 = vmatprep.mubr.f32.mxu0 0.0
    %348 = vmatmul.mubr.f32.gmra.mrb[0].mxu0 %v232
    %v349 = vpop.f32.mrb[0].mxu0
    %v350 = vadd.f32 0.0, %v349
    %v351 = vpop.f32.mrb[0].mxu0
    %352 = vmatprep.mubr.f32.mxu0 0.0
    %353 = vmatmul.mubr.f32.gmra.mrb[0].mxu0 %v235
    %v354 = vpop.f32.mrb[0].mxu0
    %v355 = vadd.f32 0.0, %v354
    %v356 = vpop.f32.mrb[0].mxu0
    %357 = vmatprep.mubr.f32.mxu0 0.0
    %358 = vmatmul.mubr.f32.gmra.mrb[0].mxu0 %v238
    %v359 = vpop.f32.mrb[0].mxu0
    %v360 = vadd.f32 0.0, %v359
    %v361 = vpop.f32.mrb[0].mxu0
    %362 = vmatprep.mubr.f32.mxu0 0.0
    %363 = vmatmul.mubr.f32.gmra.mrb[0].mxu0 %v241
    %v364 = vpop.f32.mrb[0].mxu0
    %v365 = vadd.f32 0.0, %v364
    %v366 = vpop.f32.mrb[0].mxu0
    %367 = vdwg.mxu0
    %v368 = vmul.f32 %v21, %v21
    %v369 = vmul.f32 %v22, %v22
    %v370 = vmul.f32 %v23, %v23
    %v371 = vmul.f32 %v24, %v24
    %v372 = vmul.f32 %v25, %v25
    %v373 = vmul.f32 %v26, %v26
    %v374 = vmul.f32 %v27, %v27
    %v375 = vmul.f32 %v28, %v28
    %v376 = vmul.f32 %v29, %v29
    %v377 = vmul.f32 %v30, %v30
    %v378 = vmul.f32 %v31, %v31
    %v379 = vmul.f32 %v32, %v32
    %v381 = vsel %vm45, %v368, 0
    %v384 = vsel %vm45, %v369, 0
    %v387 = vsel %vm45, %v370, 0
    %v390 = vsel %vm45, %v371, 0
    %v393 = vsel %vm45, %v372, 0
    %v396 = vsel %vm45, %v373, 0
    %v399 = vsel %vm45, %v374, 0
    %v402 = vsel %vm45, %v375, 0
    %v405 = vsel %vm45, %v376, 0
    %v408 = vsel %vm45, %v377, 0
    %v411 = vsel %vm45, %v378, 0
    %v414 = vsel %vm45, %v379, 0
    %416 = vmatprep.subr.mxu0 0.0
    %417 = vmatpush1.msra.mxu0 %v19
    %418 = vmatprep.subr.mxu0 0.0
    %419 = vmatpush1.msra.mxu0 %v20
    %420 = vmatprep.subr.mxu0 0.0
    %421 = vmatpush1.msra.mxu0 0.0
    %422 = vmatprep.subr.mxu0 0.0
    %423 = vmatpush1.msra.mxu0 0.0
    %424 = vmatprep.subr.mxu0 0.0
    %425 = vmatpush1.msra.mxu0 0.0
    %426 = vmatprep.subr.mxu0 0.0
    %427 = vmatpush1.msra.mxu0 0.0
    %428 = vmatprep.subr.mxu0 0.0
    %429 = vmatpush1.msra.mxu0 0.0
    %430 = vmatprep.subr.mxu0 0.0
    %431 = vmatpush1.msra.mxu0 0.0
    %432 = vmatprep.subr.mxu0 0.0
    %433 = vmatpush1.msra.mxu0 0.0
    %434 = vmatprep.subr.mxu0 0.0
    %435 = vmatpush1.msra.mxu0 0.0
    %436 = vmatprep.subr.mxu0 0.0
    %437 = vmatpush1.msra.mxu0 0.0
    %438 = vmatprep.subr.mxu0 0.0
    %439 = vmatpush1.msra.mxu0 0.0
    %440 = vmatprep.subr.mxu0 0.0
    %441 = vmatpush1.msra.mxu0 0.0
    %442 = vmatprep.subr.mxu0 0.0
    %443 = vmatpush1.msra.mxu0 0.0
    %444 = vmatprep.subr.mxu0 0.0
    %445 = vmatpush1.msra.mxu0 0.0
    %446 = vmatprep.subr.mxu0 0.0
    %447 = vmatpush1.msra.mxu0 0.0
    %448 = vmatprep.subr.mxu0 0.0
    %449 = vmatpush1.msra.mxu0 0.0
    %450 = vmatprep.subr.mxu0 0.0
    %451 = vmatpush1.msra.mxu0 0.0
    %452 = vmatprep.subr.mxu0 0.0
    %453 = vmatpush1.msra.mxu0 0.0
    %454 = vmatprep.subr.mxu0 0.0
    %455 = vmatpush1.msra.mxu0 0.0
    %456 = vmatprep.subr.mxu0 0.0
    %457 = vmatpush1.msra.mxu0 0.0
    %458 = vmatprep.subr.mxu0 0.0
    %459 = vmatpush1.msra.mxu0 0.0
    %460 = vmatprep.subr.mxu0 0.0
    %461 = vmatpush1.msra.mxu0 0.0
    %462 = vmatprep.subr.mxu0 0.0
    %463 = vmatpush1.msra.mxu0 0.0
    %464 = vmatprep.subr.mxu0 0.0
    %465 = vmatpush1.msra.mxu0 0.0
    %466 = vmatprep.subr.mxu0 0.0
    %467 = vmatpush1.msra.mxu0 0.0
    %468 = vmatprep.subr.mxu0 0.0
    %469 = vmatpush1.msra.mxu0 0.0
    %470 = vmatprep.subr.mxu0 0.0
    %471 = vmatpush1.msra.mxu0 0.0
    %472 = vmatprep.subr.mxu0 0.0
    %473 = vmatpush1.msra.mxu0 0.0
    %474 = vmatprep.subr.mxu0 0.0
    %475 = vmatpush1.msra.mxu0 0.0
    %476 = vmatprep.subr.mxu0 0.0
    %477 = vmatpush1.msra.mxu0 0.0
    %478 = vmatprep.subr.mxu0 0.0
    %479 = vmatpush1.msra.mxu0 0.0
    %480 = vmatprep.mubr.f32.mxu0 0.0
    %481 = vmatmul.mubr.f32.gmra.mrb[0].mxu0 %v381
    %v482 = vpop.f32.mrb[0].mxu0
    %v483 = vadd.f32 0.0, %v482
    %v484 = vpop.f32.mrb[0].mxu0
    %485 = vmatprep.mubr.f32.mxu0 0.0
    %486 = vmatmul.mubr.f32.gmra.mrb[0].mxu0 %v384
    %v487 = vpop.f32.mrb[0].mxu0
    %v488 = vadd.f32 0.0, %v487
    %v489 = vpop.f32.mrb[0].mxu0
    %490 = vmatprep.mubr.f32.mxu0 0.0
    %491 = vmatmul.mubr.f32.gmra.mrb[0].mxu0 %v387
    %v492 = vpop.f32.mrb[0].mxu0
    %v493 = vadd.f32 0.0, %v492
    %v494 = vpop.f32.mrb[0].mxu0
    %495 = vmatprep.mubr.f32.mxu0 0.0
    %496 = vmatmul.mubr.f32.gmra.mrb[0].mxu0 %v390
    %v497 = vpop.f32.mrb[0].mxu0
    %v498 = vadd.f32 0.0, %v497
    %v499 = vpop.f32.mrb[0].mxu0
    %500 = vmatprep.mubr.f32.mxu0 0.0
    %501 = vmatmul.mubr.f32.gmra.mrb[0].mxu0 %v393
    %v502 = vpop.f32.mrb[0].mxu0
    %v503 = vadd.f32 0.0, %v502
    %v504 = vpop.f32.mrb[0].mxu0
    %505 = vmatprep.mubr.f32.mxu0 0.0
    %506 = vmatmul.mubr.f32.gmra.mrb[0].mxu0 %v396
    %v507 = vpop.f32.mrb[0].mxu0
    %v508 = vadd.f32 0.0, %v507
    %v509 = vpop.f32.mrb[0].mxu0
    %510 = vmatprep.mubr.f32.mxu0 0.0
    %511 = vmatmul.mubr.f32.gmra.mrb[0].mxu0 %v399
    %v512 = vpop.f32.mrb[0].mxu0
    %v513 = vadd.f32 0.0, %v512
    %v514 = vpop.f32.mrb[0].mxu0
    %515 = vmatprep.mubr.f32.mxu0 0.0
    %516 = vmatmul.mubr.f32.gmra.mrb[0].mxu0 %v402
    %v517 = vpop.f32.mrb[0].mxu0
    %v518 = vadd.f32 0.0, %v517
    %v519 = vpop.f32.mrb[0].mxu0
    %520 = vmatprep.mubr.f32.mxu0 0.0
    %521 = vmatmul.mubr.f32.gmra.mrb[0].mxu0 %v405
    %v522 = vpop.f32.mrb[0].mxu0
    %v523 = vadd.f32 0.0, %v522
    %v524 = vpop.f32.mrb[0].mxu0
    %525 = vmatprep.mubr.f32.mxu0 0.0
    %526 = vmatmul.mubr.f32.gmra.mrb[0].mxu0 %v408
    %v527 = vpop.f32.mrb[0].mxu0
    %v528 = vadd.f32 0.0, %v527
    %v529 = vpop.f32.mrb[0].mxu0
    %530 = vmatprep.mubr.f32.mxu0 0.0
    %531 = vmatmul.mubr.f32.gmra.mrb[0].mxu0 %v411
    %v532 = vpop.f32.mrb[0].mxu0
    %v533 = vadd.f32 0.0, %v532
    %v534 = vpop.f32.mrb[0].mxu0
    %535 = vmatprep.mubr.f32.mxu0 0.0
    %536 = vmatmul.mubr.f32.gmra.mrb[0].mxu0 %v414
    %v537 = vpop.f32.mrb[0].mxu0
    %v538 = vadd.f32 0.0, %v537
    %v539 = vpop.f32.mrb[0].mxu0
    %540 = vdwg.mxu0
    %v541 = vmul.f32 %v33, %v33
    %v542 = vmul.f32 %v34, %v34
    %v543 = vmul.f32 %v35, %v35
    %v544 = vmul.f32 %v36, %v36
    %v545 = vmul.f32 %v37, %v37
    %v546 = vmul.f32 %v38, %v38
    %v547 = vmul.f32 %v39, %v39
    %v548 = vmul.f32 %v40, %v40
    %v549 = vmul.f32 %v41, %v41
    %v550 = vmul.f32 %v42, %v42
    %v551 = vmul.f32 %v43, %v43
    %v552 = vmul.f32 %v44, %v44
    %v554 = vsel %vm45, %v541, 0
    %v557 = vsel %vm45, %v542, 0
    %v560 = vsel %vm45, %v543, 0
    %v563 = vsel %vm45, %v544, 0
    %v566 = vsel %vm45, %v545, 0
    %v569 = vsel %vm45, %v546, 0
    %v572 = vsel %vm45, %v547, 0
    %v575 = vsel %vm45, %v548, 0
    %v578 = vsel %vm45, %v549, 0
    %v581 = vsel %vm45, %v550, 0
    %v584 = vsel %vm45, %v551, 0
    %v587 = vsel %vm45, %v552, 0
    %589 = vmatprep.subr.mxu0 0.0
    %590 = vmatpush1.msra.mxu0 %v19
    %591 = vmatprep.subr.mxu0 0.0
    %592 = vmatpush1.msra.mxu0 %v20
    %593 = vmatprep.subr.mxu0 0.0
    %594 = vmatpush1.msra.mxu0 0.0
    %595 = vmatprep.subr.mxu0 0.0
    %596 = vmatpush1.msra.mxu0 0.0
    %597 = vmatprep.subr.mxu0 0.0
    %598 = vmatpush1.msra.mxu0 0.0
    %599 = vmatprep.subr.mxu0 0.0
    %600 = vmatpush1.msra.mxu0 0.0
    %601 = vmatprep.subr.mxu0 0.0
    %602 = vmatpush1.msra.mxu0 0.0
    %603 = vmatprep.subr.mxu0 0.0
    %604 = vmatpush1.msra.mxu0 0.0
    %605 = vmatprep.subr.mxu0 0.0
    %606 = vmatpush1.msra.mxu0 0.0
    %607 = vmatprep.subr.mxu0 0.0
    %608 = vmatpush1.msra.mxu0 0.0
    %609 = vmatprep.subr.mxu0 0.0
    %610 = vmatpush1.msra.mxu0 0.0
    %611 = vmatprep.subr.mxu0 0.0
    %612 = vmatpush1.msra.mxu0 0.0
    %613 = vmatprep.subr.mxu0 0.0
    %614 = vmatpush1.msra.mxu0 0.0
    %615 = vmatprep.subr.mxu0 0.0
    %616 = vmatpush1.msra.mxu0 0.0
    %617 = vmatprep.subr.mxu0 0.0
    %618 = vmatpush1.msra.mxu0 0.0
    %619 = vmatprep.subr.mxu0 0.0
    %620 = vmatpush1.msra.mxu0 0.0
    %621 = vmatprep.subr.mxu0 0.0
    %622 = vmatpush1.msra.mxu0 0.0
    %623 = vmatprep.subr.mxu0 0.0
    %624 = vmatpush1.msra.mxu0 0.0
    %625 = vmatprep.subr.mxu0 0.0
    %626 = vmatpush1.msra.mxu0 0.0
    %627 = vmatprep.subr.mxu0 0.0
    %628 = vmatpush1.msra.mxu0 0.0
    %629 = vmatprep.subr.mxu0 0.0
    %630 = vmatpush1.msra.mxu0 0.0
    %631 = vmatprep.subr.mxu0 0.0
    %632 = vmatpush1.msra.mxu0 0.0
    %633 = vmatprep.subr.mxu0 0.0
    %634 = vmatpush1.msra.mxu0 0.0
    %635 = vmatprep.subr.mxu0 0.0
    %636 = vmatpush1.msra.mxu0 0.0
    %637 = vmatprep.subr.mxu0 0.0
    %638 = vmatpush1.msra.mxu0 0.0
    %639 = vmatprep.subr.mxu0 0.0
    %640 = vmatpush1.msra.mxu0 0.0
    %641 = vmatprep.subr.mxu0 0.0
    %642 = vmatpush1.msra.mxu0 0.0
    %643 = vmatprep.subr.mxu0 0.0
    %644 = vmatpush1.msra.mxu0 0.0
    %645 = vmatprep.subr.mxu0 0.0
    %646 = vmatpush1.msra.mxu0 0.0
    %647 = vmatprep.subr.mxu0 0.0
    %648 = vmatpush1.msra.mxu0 0.0
    %649 = vmatprep.subr.mxu0 0.0
    %650 = vmatpush1.msra.mxu0 0.0
    %651 = vmatprep.subr.mxu0 0.0
    %652 = vmatpush1.msra.mxu0 0.0
    %653 = vmatprep.mubr.f32.mxu0 0.0
    %654 = vmatmul.mubr.f32.gmra.mrb[0].mxu0 %v554
    %v655 = vpop.f32.mrb[0].mxu0
    %v656 = vadd.f32 0.0, %v655
    %v657 = vpop.f32.mrb[0].mxu0
    %658 = vmatprep.mubr.f32.mxu0 0.0
    %659 = vmatmul.mubr.f32.gmra.mrb[0].mxu0 %v557
    %v660 = vpop.f32.mrb[0].mxu0
    %v661 = vadd.f32 0.0, %v660
    %v662 = vpop.f32.mrb[0].mxu0
    %663 = vmatprep.mubr.f32.mxu0 0.0
    %664 = vmatmul.mubr.f32.gmra.mrb[0].mxu0 %v560
    %v665 = vpop.f32.mrb[0].mxu0
    %v666 = vadd.f32 0.0, %v665
    %v667 = vpop.f32.mrb[0].mxu0
    %668 = vmatprep.mubr.f32.mxu0 0.0
    %669 = vmatmul.mubr.f32.gmra.mrb[0].mxu0 %v563
    %v670 = vpop.f32.mrb[0].mxu0
    %v671 = vadd.f32 0.0, %v670
    %v672 = vpop.f32.mrb[0].mxu0
    %673 = vmatprep.mubr.f32.mxu0 0.0
    %674 = vmatmul.mubr.f32.gmra.mrb[0].mxu0 %v566
    %v675 = vpop.f32.mrb[0].mxu0
    %v676 = vadd.f32 0.0, %v675
    %v677 = vpop.f32.mrb[0].mxu0
    %678 = vmatprep.mubr.f32.mxu0 0.0
    %679 = vmatmul.mubr.f32.gmra.mrb[0].mxu0 %v569
    %v680 = vpop.f32.mrb[0].mxu0
    %v681 = vadd.f32 0.0, %v680
    %v682 = vpop.f32.mrb[0].mxu0
    %683 = vmatprep.mubr.f32.mxu0 0.0
    %684 = vmatmul.mubr.f32.gmra.mrb[0].mxu0 %v572
    %v685 = vpop.f32.mrb[0].mxu0
    %v686 = vadd.f32 0.0, %v685
    %v687 = vpop.f32.mrb[0].mxu0
    %688 = vmatprep.mubr.f32.mxu0 0.0
    %689 = vmatmul.mubr.f32.gmra.mrb[0].mxu0 %v575
    %v690 = vpop.f32.mrb[0].mxu0
    %v691 = vadd.f32 0.0, %v690
    %v692 = vpop.f32.mrb[0].mxu0
    %693 = vmatprep.mubr.f32.mxu0 0.0
    %694 = vmatmul.mubr.f32.gmra.mrb[0].mxu0 %v578
    %v695 = vpop.f32.mrb[0].mxu0
    %v696 = vadd.f32 0.0, %v695
    %v697 = vpop.f32.mrb[0].mxu0
    %698 = vmatprep.mubr.f32.mxu0 0.0
    %699 = vmatmul.mubr.f32.gmra.mrb[0].mxu0 %v581
    %v700 = vpop.f32.mrb[0].mxu0
    %v701 = vadd.f32 0.0, %v700
    %v702 = vpop.f32.mrb[0].mxu0
    %703 = vmatprep.mubr.f32.mxu0 0.0
    %704 = vmatmul.mubr.f32.gmra.mrb[0].mxu0 %v584
    %v705 = vpop.f32.mrb[0].mxu0
    %v706 = vadd.f32 0.0, %v705
    %v707 = vpop.f32.mrb[0].mxu0
    %708 = vmatprep.mubr.f32.mxu0 0.0
    %709 = vmatmul.mubr.f32.gmra.mrb[0].mxu0 %v587
    %v710 = vpop.f32.mrb[0].mxu0
    %v711 = vadd.f32 0.0, %v710
    %v712 = vpop.f32.mrb[0].mxu0
    %713 = vdwg.mxu0
    %v714 = vmul.f32 %v21, %v33
    %v715 = vmul.f32 %v22, %v34
    %v716 = vmul.f32 %v23, %v35
    %v717 = vmul.f32 %v24, %v36
    %v718 = vmul.f32 %v25, %v37
    %v719 = vmul.f32 %v26, %v38
    %v720 = vmul.f32 %v27, %v39
    %v721 = vmul.f32 %v28, %v40
    %v722 = vmul.f32 %v29, %v41
    %v723 = vmul.f32 %v30, %v42
    %v724 = vmul.f32 %v31, %v43
    %v725 = vmul.f32 %v32, %v44
    %v727 = vsel %vm45, %v714, 0
    %v730 = vsel %vm45, %v715, 0
    %v733 = vsel %vm45, %v716, 0
    %v736 = vsel %vm45, %v717, 0
    %v739 = vsel %vm45, %v718, 0
    %v742 = vsel %vm45, %v719, 0
    %v745 = vsel %vm45, %v720, 0
    %v748 = vsel %vm45, %v721, 0
    %v751 = vsel %vm45, %v722, 0
    %v754 = vsel %vm45, %v723, 0
    %v757 = vsel %vm45, %v724, 0
    %v760 = vsel %vm45, %v725, 0
    %762 = vmatprep.subr.mxu0 0.0
    %763 = vmatpush1.msra.mxu0 %v19
    %764 = vmatprep.subr.mxu0 0.0
    %765 = vmatpush1.msra.mxu0 %v20
    %766 = vmatprep.subr.mxu0 0.0
    %767 = vmatpush1.msra.mxu0 0.0
    %768 = vmatprep.subr.mxu0 0.0
    %769 = vmatpush1.msra.mxu0 0.0
    %770 = vmatprep.subr.mxu0 0.0
    %771 = vmatpush1.msra.mxu0 0.0
    %772 = vmatprep.subr.mxu0 0.0
    %773 = vmatpush1.msra.mxu0 0.0
    %774 = vmatprep.subr.mxu0 0.0
    %775 = vmatpush1.msra.mxu0 0.0
    %776 = vmatprep.subr.mxu0 0.0
    %777 = vmatpush1.msra.mxu0 0.0
    %778 = vmatprep.subr.mxu0 0.0
    %779 = vmatpush1.msra.mxu0 0.0
    %780 = vmatprep.subr.mxu0 0.0
    %781 = vmatpush1.msra.mxu0 0.0
    %782 = vmatprep.subr.mxu0 0.0
    %783 = vmatpush1.msra.mxu0 0.0
    %784 = vmatprep.subr.mxu0 0.0
    %785 = vmatpush1.msra.mxu0 0.0
    %786 = vmatprep.subr.mxu0 0.0
    %787 = vmatpush1.msra.mxu0 0.0
    %788 = vmatprep.subr.mxu0 0.0
    %789 = vmatpush1.msra.mxu0 0.0
    %790 = vmatprep.subr.mxu0 0.0
    %791 = vmatpush1.msra.mxu0 0.0
    %792 = vmatprep.subr.mxu0 0.0
    %793 = vmatpush1.msra.mxu0 0.0
    %794 = vmatprep.subr.mxu0 0.0
    %795 = vmatpush1.msra.mxu0 0.0
    %796 = vmatprep.subr.mxu0 0.0
    %797 = vmatpush1.msra.mxu0 0.0
    %798 = vmatprep.subr.mxu0 0.0
    %799 = vmatpush1.msra.mxu0 0.0
    %800 = vmatprep.subr.mxu0 0.0
    %801 = vmatpush1.msra.mxu0 0.0
    %802 = vmatprep.subr.mxu0 0.0
    %803 = vmatpush1.msra.mxu0 0.0
    %804 = vmatprep.subr.mxu0 0.0
    %805 = vmatpush1.msra.mxu0 0.0
    %806 = vmatprep.subr.mxu0 0.0
    %807 = vmatpush1.msra.mxu0 0.0
    %808 = vmatprep.subr.mxu0 0.0
    %809 = vmatpush1.msra.mxu0 0.0
    %810 = vmatprep.subr.mxu0 0.0
    %811 = vmatpush1.msra.mxu0 0.0
    %812 = vmatprep.subr.mxu0 0.0
    %813 = vmatpush1.msra.mxu0 0.0
    %814 = vmatprep.subr.mxu0 0.0
    %815 = vmatpush1.msra.mxu0 0.0
    %816 = vmatprep.subr.mxu0 0.0
    %817 = vmatpush1.msra.mxu0 0.0
    %818 = vmatprep.subr.mxu0 0.0
    %819 = vmatpush1.msra.mxu0 0.0
    %820 = vmatprep.subr.mxu0 0.0
    %821 = vmatpush1.msra.mxu0 0.0
    %822 = vmatprep.subr.mxu0 0.0
    %823 = vmatpush1.msra.mxu0 0.0
    %824 = vmatprep.subr.mxu0 0.0
    %825 = vmatpush1.msra.mxu0 0.0
    %826 = vmatprep.mubr.f32.mxu0 0.0
    %827 = vmatmul.mubr.f32.gmra.mrb[0].mxu0 %v727
    %v828 = vpop.f32.mrb[0].mxu0
    %v829 = vadd.f32 0.0, %v828
    %v830 = vpop.f32.mrb[0].mxu0
    %831 = vmatprep.mubr.f32.mxu0 0.0
    %832 = vmatmul.mubr.f32.gmra.mrb[0].mxu0 %v730
    %v833 = vpop.f32.mrb[0].mxu0
    %v834 = vadd.f32 0.0, %v833
    %v835 = vpop.f32.mrb[0].mxu0
    %836 = vmatprep.mubr.f32.mxu0 0.0
    %837 = vmatmul.mubr.f32.gmra.mrb[0].mxu0 %v733
    %v838 = vpop.f32.mrb[0].mxu0
    %v839 = vadd.f32 0.0, %v838
    %v840 = vpop.f32.mrb[0].mxu0
    %841 = vmatprep.mubr.f32.mxu0 0.0
    %842 = vmatmul.mubr.f32.gmra.mrb[0].mxu0 %v736
    %v843 = vpop.f32.mrb[0].mxu0
    %v844 = vadd.f32 0.0, %v843
    %v845 = vpop.f32.mrb[0].mxu0
    %846 = vmatprep.mubr.f32.mxu0 0.0
    %847 = vmatmul.mubr.f32.gmra.mrb[0].mxu0 %v739
    %v848 = vpop.f32.mrb[0].mxu0
    %v849 = vadd.f32 0.0, %v848
    %v850 = vpop.f32.mrb[0].mxu0
    %851 = vmatprep.mubr.f32.mxu0 0.0
    %852 = vmatmul.mubr.f32.gmra.mrb[0].mxu0 %v742
    %v853 = vpop.f32.mrb[0].mxu0
    %v854 = vadd.f32 0.0, %v853
    %v855 = vpop.f32.mrb[0].mxu0
    %856 = vmatprep.mubr.f32.mxu0 0.0
    %857 = vmatmul.mubr.f32.gmra.mrb[0].mxu0 %v745
    %v858 = vpop.f32.mrb[0].mxu0
    %v859 = vadd.f32 0.0, %v858
    %v860 = vpop.f32.mrb[0].mxu0
    %861 = vmatprep.mubr.f32.mxu0 0.0
    %862 = vmatmul.mubr.f32.gmra.mrb[0].mxu0 %v748
    %v863 = vpop.f32.mrb[0].mxu0
    %v864 = vadd.f32 0.0, %v863
    %v865 = vpop.f32.mrb[0].mxu0
    %866 = vmatprep.mubr.f32.mxu0 0.0
    %867 = vmatmul.mubr.f32.gmra.mrb[0].mxu0 %v751
    %v868 = vpop.f32.mrb[0].mxu0
    %v869 = vadd.f32 0.0, %v868
    %v870 = vpop.f32.mrb[0].mxu0
    %871 = vmatprep.mubr.f32.mxu0 0.0
    %872 = vmatmul.mubr.f32.gmra.mrb[0].mxu0 %v754
    %v873 = vpop.f32.mrb[0].mxu0
    %v874 = vadd.f32 0.0, %v873
    %v875 = vpop.f32.mrb[0].mxu0
    %876 = vmatprep.mubr.f32.mxu0 0.0
    %877 = vmatmul.mubr.f32.gmra.mrb[0].mxu0 %v757
    %v878 = vpop.f32.mrb[0].mxu0
    %v879 = vadd.f32 0.0, %v878
    %v880 = vpop.f32.mrb[0].mxu0
    %881 = vmatprep.mubr.f32.mxu0 0.0
    %882 = vmatmul.mubr.f32.gmra.mrb[0].mxu0 %v760
    %v883 = vpop.f32.mrb[0].mxu0
    %v884 = vadd.f32 0.0, %v883
    %v885 = vpop.f32.mrb[0].mxu0
    %886 = vdwg.mxu0
    %v887 = vlaneseq
    %v888 = vshrl.u32 %v887, 7
    %v889 = vlaneseq
    %v890 = vand.u32 %v889, 127
    %vm891 = vcmp.lt.s32.totalorder %v888, 6
    %vm892 = vcmp.lt.s32.totalorder %v890, 6
    %vm893 = vmand %vm891, %vm892
    %v894 = vsel %vm893, 1, 0
    %v895 = vcvt.s32.f32 %v894
    %v897 = vsel %vm45, %v18, 0
    %899 = vmatprep.subr.mxu0 %v310
    %900 = vmatpush1.msra.mxu0 %v149
    %901 = vmatprep.subr.mxu0 %v315
    %902 = vmatpush1.msra.mxu0 %v154
    %903 = vmatprep.subr.mxu0 0.0
    %904 = vmatpush1.msra.mxu0 0.0
    %905 = vmatprep.subr.mxu0 0.0
    %906 = vmatpush1.msra.mxu0 0.0
    %907 = vmatprep.subr.mxu0 0.0
    %908 = vmatpush1.msra.mxu0 0.0
    %909 = vmatprep.subr.mxu0 0.0
    %910 = vmatpush1.msra.mxu0 0.0
    %911 = vmatprep.subr.mxu0 0.0
    %912 = vmatpush1.msra.mxu0 0.0
    %913 = vmatprep.subr.mxu0 0.0
    %914 = vmatpush1.msra.mxu0 0.0
    %915 = vmatprep.subr.mxu0 0.0
    %916 = vmatpush1.msra.mxu0 0.0
    %917 = vmatprep.subr.mxu0 0.0
    %918 = vmatpush1.msra.mxu0 0.0
    %919 = vmatprep.subr.mxu0 0.0
    %920 = vmatpush1.msra.mxu0 0.0
    %921 = vmatprep.subr.mxu0 0.0
    %922 = vmatpush1.msra.mxu0 0.0
    %923 = vmatprep.subr.mxu0 0.0
    %924 = vmatpush1.msra.mxu0 0.0
    %925 = vmatprep.subr.mxu0 0.0
    %926 = vmatpush1.msra.mxu0 0.0
    %927 = vmatprep.subr.mxu0 0.0
    %928 = vmatpush1.msra.mxu0 0.0
    %929 = vmatprep.subr.mxu0 0.0
    %930 = vmatpush1.msra.mxu0 0.0
    %931 = vmatprep.subr.mxu0 0.0
    %932 = vmatpush1.msra.mxu0 0.0
    %933 = vmatprep.subr.mxu0 0.0
    %934 = vmatpush1.msra.mxu0 0.0
    %935 = vmatprep.subr.mxu0 0.0
    %936 = vmatpush1.msra.mxu0 0.0
    %937 = vmatprep.subr.mxu0 0.0
    %938 = vmatpush1.msra.mxu0 0.0
    %939 = vmatprep.subr.mxu0 0.0
    %940 = vmatpush1.msra.mxu0 0.0
    %941 = vmatprep.subr.mxu0 0.0
    %942 = vmatpush1.msra.mxu0 0.0
    %943 = vmatprep.subr.mxu0 0.0
    %944 = vmatpush1.msra.mxu0 0.0
    %945 = vmatprep.subr.mxu0 0.0
    %946 = vmatpush1.msra.mxu0 0.0
    %947 = vmatprep.subr.mxu0 0.0
    %948 = vmatpush1.msra.mxu0 0.0
    %949 = vmatprep.subr.mxu0 0.0
    %950 = vmatpush1.msra.mxu0 0.0
    %951 = vmatprep.subr.mxu0 0.0
    %952 = vmatpush1.msra.mxu0 0.0
    %953 = vmatprep.subr.mxu0 0.0
    %954 = vmatpush1.msra.mxu0 0.0
    %955 = vmatprep.subr.mxu0 0.0
    %956 = vmatpush1.msra.mxu0 0.0
    %957 = vmatprep.subr.mxu0 0.0
    %958 = vmatpush1.msra.mxu0 0.0
    %959 = vmatprep.subr.mxu0 0.0
    %960 = vmatpush1.msra.mxu0 0.0
    %961 = vmatprep.subr.mxu0 0.0
    %962 = vmatpush1.msra.mxu0 0.0
    %963 = vmatprep.mubr.f32.mxu0 0.0
    %964 = vmatmul.mubr.f32.gmra.mrb[0].mxu0 %v897
    %v965 = vpop.f32.mrb[0].mxu0
    %v966 = vadd.f32 0.0, %v965
    %v967 = vpop.f32.mrb[0].mxu0
    %v968 = vadd.f32 0.0, %v967
    %969 = vdwg.mxu0
    %970 = vmatprep.subr.mxu0 %v656
    %971 = vmatpush1.msra.mxu0 %v483
    %972 = vmatprep.subr.mxu0 %v661
    %973 = vmatpush1.msra.mxu0 %v488
    %974 = vmatprep.subr.mxu0 0.0
    %975 = vmatpush1.msra.mxu0 0.0
    %976 = vmatprep.subr.mxu0 0.0
    %977 = vmatpush1.msra.mxu0 0.0
    %978 = vmatprep.subr.mxu0 0.0
    %979 = vmatpush1.msra.mxu0 0.0
    %980 = vmatprep.subr.mxu0 0.0
    %981 = vmatpush1.msra.mxu0 0.0
    %982 = vmatprep.subr.mxu0 0.0
    %983 = vmatpush1.msra.mxu0 0.0
    %984 = vmatprep.subr.mxu0 0.0
    %985 = vmatpush1.msra.mxu0 0.0
    %986 = vmatprep.subr.mxu0 0.0
    %987 = vmatpush1.msra.mxu0 0.0
    %988 = vmatprep.subr.mxu0 0.0
    %989 = vmatpush1.msra.mxu0 0.0
    %990 = vmatprep.subr.mxu0 0.0
    %991 = vmatpush1.msra.mxu0 0.0
    %992 = vmatprep.subr.mxu0 0.0
    %993 = vmatpush1.msra.mxu0 0.0
    %994 = vmatprep.subr.mxu0 0.0
    %995 = vmatpush1.msra.mxu0 0.0
    %996 = vmatprep.subr.mxu0 0.0
    %997 = vmatpush1.msra.mxu0 0.0
    %998 = vmatprep.subr.mxu0 0.0
    %999 = vmatpush1.msra.mxu0 0.0
    %1000 = vmatprep.subr.mxu0 0.0
    %1001 = vmatpush1.msra.mxu0 0.0
    %1002 = vmatprep.subr.mxu0 0.0
    %1003 = vmatpush1.msra.mxu0 0.0
    %1004 = vmatprep.subr.mxu0 0.0
    %1005 = vmatpush1.msra.mxu0 0.0
    %1006 = vmatprep.subr.mxu0 0.0
    %1007 = vmatpush1.msra.mxu0 0.0
    %1008 = vmatprep.subr.mxu0 0.0
    %1009 = vmatpush1.msra.mxu0 0.0
    %1010 = vmatprep.subr.mxu0 0.0
    %1011 = vmatpush1.msra.mxu0 0.0
    %1012 = vmatprep.subr.mxu0 0.0
    %1013 = vmatpush1.msra.mxu0 0.0
    %1014 = vmatprep.subr.mxu0 0.0
    %1015 = vmatpush1.msra.mxu0 0.0
    %1016 = vmatprep.subr.mxu0 0.0
    %1017 = vmatpush1.msra.mxu0 0.0
    %1018 = vmatprep.subr.mxu0 0.0
    %1019 = vmatpush1.msra.mxu0 0.0
    %1020 = vmatprep.subr.mxu0 0.0
    %1021 = vmatpush1.msra.mxu0 0.0
    %1022 = vmatprep.subr.mxu0 0.0
    %1023 = vmatpush1.msra.mxu0 0.0
    %1024 = vmatprep.subr.mxu0 0.0
    %1025 = vmatpush1.msra.mxu0 0.0
    %1026 = vmatprep.subr.mxu0 0.0
    %1027 = vmatpush1.msra.mxu0 0.0
    %1028 = vmatprep.subr.mxu0 0.0
    %1029 = vmatpush1.msra.mxu0 0.0
    %1030 = vmatprep.subr.mxu0 0.0
    %1031 = vmatpush1.msra.mxu0 0.0
    %1032 = vmatprep.subr.mxu0 0.0
    %1033 = vmatpush1.msra.mxu0 0.0
    %1034 = vmatprep.mubr.f32.mxu0 0.0
    %1035 = vmatmul.mubr.f32.gmra.mrb[0].mxu0 %v897
    %v1036 = vpop.f32.mrb[0].mxu0
    %v1037 = vadd.f32 0.0, %v1036
    %v1038 = vpop.f32.mrb[0].mxu0
    %v1039 = vadd.f32 0.0, %v1038
    %1040 = vdwg.mxu0
    %1041 = vmatprep.subr.mxu0 0.0
    %1042 = vmatpush1.msra.mxu0 %v829
    %1043 = vmatprep.subr.mxu0 0.0
    %1044 = vmatpush1.msra.mxu0 %v834
    %1045 = vmatprep.subr.mxu0 0.0
    %1046 = vmatpush1.msra.mxu0 0.0
    %1047 = vmatprep.subr.mxu0 0.0
    %1048 = vmatpush1.msra.mxu0 0.0
    %1049 = vmatprep.subr.mxu0 0.0
    %1050 = vmatpush1.msra.mxu0 0.0
    %1051 = vmatprep.subr.mxu0 0.0
    %1052 = vmatpush1.msra.mxu0 0.0
    %1053 = vmatprep.subr.mxu0 0.0
    %1054 = vmatpush1.msra.mxu0 0.0
    %1055 = vmatprep.subr.mxu0 0.0
    %1056 = vmatpush1.msra.mxu0 0.0
    %1057 = vmatprep.subr.mxu0 0.0
    %1058 = vmatpush1.msra.mxu0 0.0
    %1059 = vmatprep.subr.mxu0 0.0
    %1060 = vmatpush1.msra.mxu0 0.0
    %1061 = vmatprep.subr.mxu0 0.0
    %1062 = vmatpush1.msra.mxu0 0.0
    %1063 = vmatprep.subr.mxu0 0.0
    %1064 = vmatpush1.msra.mxu0 0.0
    %1065 = vmatprep.subr.mxu0 0.0
    %1066 = vmatpush1.msra.mxu0 0.0
    %1067 = vmatprep.subr.mxu0 0.0
    %1068 = vmatpush1.msra.mxu0 0.0
    %1069 = vmatprep.subr.mxu0 0.0
    %1070 = vmatpush1.msra.mxu0 0.0
    %1071 = vmatprep.subr.mxu0 0.0
    %1072 = vmatpush1.msra.mxu0 0.0
    %1073 = vmatprep.subr.mxu0 0.0
    %1074 = vmatpush1.msra.mxu0 0.0
    %1075 = vmatprep.subr.mxu0 0.0
    %1076 = vmatpush1.msra.mxu0 0.0
    %1077 = vmatprep.subr.mxu0 0.0
    %1078 = vmatpush1.msra.mxu0 0.0
    %1079 = vmatprep.subr.mxu0 0.0
    %1080 = vmatpush1.msra.mxu0 0.0
    %1081 = vmatprep.subr.mxu0 0.0
    %1082 = vmatpush1.msra.mxu0 0.0
    %1083 = vmatprep.subr.mxu0 0.0
    %1084 = vmatpush1.msra.mxu0 0.0
    %1085 = vmatprep.subr.mxu0 0.0
    %1086 = vmatpush1.msra.mxu0 0.0
    %1087 = vmatprep.subr.mxu0 0.0
    %1088 = vmatpush1.msra.mxu0 0.0
    %1089 = vmatprep.subr.mxu0 0.0
    %1090 = vmatpush1.msra.mxu0 0.0
    %1091 = vmatprep.subr.mxu0 0.0
    %1092 = vmatpush1.msra.mxu0 0.0
    %1093 = vmatprep.subr.mxu0 0.0
    %1094 = vmatpush1.msra.mxu0 0.0
    %1095 = vmatprep.subr.mxu0 0.0
    %1096 = vmatpush1.msra.mxu0 0.0
    %1097 = vmatprep.subr.mxu0 0.0
    %1098 = vmatpush1.msra.mxu0 0.0
    %1099 = vmatprep.subr.mxu0 0.0
    %1100 = vmatpush1.msra.mxu0 0.0
    %1101 = vmatprep.subr.mxu0 0.0
    %1102 = vmatpush1.msra.mxu0 0.0
    %1103 = vmatprep.subr.mxu0 0.0
    %1104 = vmatpush1.msra.mxu0 0.0
    %1105 = vmatprep.mubr.f32.mxu0 0.0
    %1106 = vmatmul.mubr.f32.gmra.mrb[0].mxu0 %v897
    %v1107 = vpop.f32.mrb[0].mxu0
    %v1108 = vadd.f32 0.0, %v1107
    %v1109 = vpop.f32.mrb[0].mxu0
    %1110 = vdwg.mxu0
    %v1111 = vmul.f32 %v966, %v966
    %v1112 = vmul.f32 %v968, %v968
    %v1113 = vmul.f32 %v966, %v968
    %v1114 = vsub.f32 %v1037, %v1111
    %v1115 = vsub.f32 %v1039, %v1112
    %v1116 = vsub.f32 %v1108, %v1113
    %v1117 = vmul.f32 %v1116, 2.0
    %v1118 = vadd.f32 %v1117, 58.5225
    %v1119 = vadd.f32 %v1114, %v1115
    %v1120 = vadd.f32 %v1119, 58.5225
    %v1121 = vrcp.pop %v1120
    %v1122 = vmul.f32 %v1118, %v1121
    %v1123 = vmul.f32 %v1113, 2.0
    %v1124 = vadd.f32 %v1123, 6.5025
    %v1125 = vadd.f32 %v1111, %v1112
    %v1126 = vadd.f32 %v1125, 6.5025
    %v1127 = vrcp.pop %v1126
    %v1128 = vmul.f32 %v1124, %v1127
    %v1129 = vmul.f32 %v1128, %v1122
    %v1130 = vmul.f32 %v1129, %v895
    %1131 = vadd.xlane.f32.xlu0 %v1130
    %v1132 = vpop.xlane.xlu0 %1131
    %v1133 = vrot.slane %v1132, 4
    %v1134 = vadd.f32 %v1132, %v1133
    %v1135 = vrot.slane %v1134, 2
    %v1136 = vadd.f32 %v1134, %v1135
    %v1137 = vrot.slane %v1136, 1
    %v1138 = vadd.f32 %v1136, %v1137
    %s1139 = vtos %v1138
    %v1140 = vstv %s1139
    %v1141 = vmul.f32 %v1140, 0.027777778
    %vm1142 = vcmp.eq.s32.totalorder %v890, 0
    %v1143 = vsel %vm1142, %v1141, 0.0
    %v1144 = vadd.f32 %v1143, 0.0
    %1145 = vmatprep.subr.mxu0 %v320
    %1146 = vmatpush1.msra.mxu0 %v159
    %1147 = vmatprep.subr.mxu0 %v325
    %1148 = vmatpush1.msra.mxu0 %v164
    %1149 = vmatprep.subr.mxu0 0.0
    %1150 = vmatpush1.msra.mxu0 0.0
    %1151 = vmatprep.subr.mxu0 0.0
    %1152 = vmatpush1.msra.mxu0 0.0
    %1153 = vmatprep.subr.mxu0 0.0
    %1154 = vmatpush1.msra.mxu0 0.0
    %1155 = vmatprep.subr.mxu0 0.0
    %1156 = vmatpush1.msra.mxu0 0.0
    %1157 = vmatprep.subr.mxu0 0.0
    %1158 = vmatpush1.msra.mxu0 0.0
    %1159 = vmatprep.subr.mxu0 0.0
    %1160 = vmatpush1.msra.mxu0 0.0
    %1161 = vmatprep.subr.mxu0 0.0
    %1162 = vmatpush1.msra.mxu0 0.0
    %1163 = vmatprep.subr.mxu0 0.0
    %1164 = vmatpush1.msra.mxu0 0.0
    %1165 = vmatprep.subr.mxu0 0.0
    %1166 = vmatpush1.msra.mxu0 0.0
    %1167 = vmatprep.subr.mxu0 0.0
    %1168 = vmatpush1.msra.mxu0 0.0
    %1169 = vmatprep.subr.mxu0 0.0
    %1170 = vmatpush1.msra.mxu0 0.0
    %1171 = vmatprep.subr.mxu0 0.0
    %1172 = vmatpush1.msra.mxu0 0.0
    %1173 = vmatprep.subr.mxu0 0.0
    %1174 = vmatpush1.msra.mxu0 0.0
    %1175 = vmatprep.subr.mxu0 0.0
    %1176 = vmatpush1.msra.mxu0 0.0
    %1177 = vmatprep.subr.mxu0 0.0
    %1178 = vmatpush1.msra.mxu0 0.0
    %1179 = vmatprep.subr.mxu0 0.0
    %1180 = vmatpush1.msra.mxu0 0.0
    %1181 = vmatprep.subr.mxu0 0.0
    %1182 = vmatpush1.msra.mxu0 0.0
    %1183 = vmatprep.subr.mxu0 0.0
    %1184 = vmatpush1.msra.mxu0 0.0
    %1185 = vmatprep.subr.mxu0 0.0
    %1186 = vmatpush1.msra.mxu0 0.0
    %1187 = vmatprep.subr.mxu0 0.0
    %1188 = vmatpush1.msra.mxu0 0.0
    %1189 = vmatprep.subr.mxu0 0.0
    %1190 = vmatpush1.msra.mxu0 0.0
    %1191 = vmatprep.subr.mxu0 0.0
    %1192 = vmatpush1.msra.mxu0 0.0
    %1193 = vmatprep.subr.mxu0 0.0
    %1194 = vmatpush1.msra.mxu0 0.0
    %1195 = vmatprep.subr.mxu0 0.0
    %1196 = vmatpush1.msra.mxu0 0.0
    %1197 = vmatprep.subr.mxu0 0.0
    %1198 = vmatpush1.msra.mxu0 0.0
    %1199 = vmatprep.subr.mxu0 0.0
    %1200 = vmatpush1.msra.mxu0 0.0
    %1201 = vmatprep.subr.mxu0 0.0
    %1202 = vmatpush1.msra.mxu0 0.0
    %1203 = vmatprep.subr.mxu0 0.0
    %1204 = vmatpush1.msra.mxu0 0.0
    %1205 = vmatprep.subr.mxu0 0.0
    %1206 = vmatpush1.msra.mxu0 0.0
    %1207 = vmatprep.subr.mxu0 0.0
    %1208 = vmatpush1.msra.mxu0 0.0
    %1209 = vmatprep.mubr.f32.mxu0 0.0
    %1210 = vmatmul.mubr.f32.gmra.mrb[0].mxu0 %v897
    %v1211 = vpop.f32.mrb[0].mxu0
    %v1212 = vadd.f32 0.0, %v1211
    %v1213 = vpop.f32.mrb[0].mxu0
    %v1214 = vadd.f32 0.0, %v1213
    %1215 = vdwg.mxu0
    %1216 = vmatprep.subr.mxu0 %v666
    %1217 = vmatpush1.msra.mxu0 %v493
    %1218 = vmatprep.subr.mxu0 %v671
    %1219 = vmatpush1.msra.mxu0 %v498
    %1220 = vmatprep.subr.mxu0 0.0
    %1221 = vmatpush1.msra.mxu0 0.0
    %1222 = vmatprep.subr.mxu0 0.0
    %1223 = vmatpush1.msra.mxu0 0.0
    %1224 = vmatprep.subr.mxu0 0.0
    %1225 = vmatpush1.msra.mxu0 0.0
    %1226 = vmatprep.subr.mxu0 0.0
    %1227 = vmatpush1.msra.mxu0 0.0
    %1228 = vmatprep.subr.mxu0 0.0
    %1229 = vmatpush1.msra.mxu0 0.0
    %1230 = vmatprep.subr.mxu0 0.0
    %1231 = vmatpush1.msra.mxu0 0.0
    %1232 = vmatprep.subr.mxu0 0.0
    %1233 = vmatpush1.msra.mxu0 0.0
    %1234 = vmatprep.subr.mxu0 0.0
    %1235 = vmatpush1.msra.mxu0 0.0
    %1236 = vmatprep.subr.mxu0 0.0
    %1237 = vmatpush1.msra.mxu0 0.0
    %1238 = vmatprep.subr.mxu0 0.0
    %1239 = vmatpush1.msra.mxu0 0.0
    %1240 = vmatprep.subr.mxu0 0.0
    %1241 = vmatpush1.msra.mxu0 0.0
    %1242 = vmatprep.subr.mxu0 0.0
    %1243 = vmatpush1.msra.mxu0 0.0
    %1244 = vmatprep.subr.mxu0 0.0
    %1245 = vmatpush1.msra.mxu0 0.0
    %1246 = vmatprep.subr.mxu0 0.0
    %1247 = vmatpush1.msra.mxu0 0.0
    %1248 = vmatprep.subr.mxu0 0.0
    %1249 = vmatpush1.msra.mxu0 0.0
    %1250 = vmatprep.subr.mxu0 0.0
    %1251 = vmatpush1.msra.mxu0 0.0
    %1252 = vmatprep.subr.mxu0 0.0
    %1253 = vmatpush1.msra.mxu0 0.0
    %1254 = vmatprep.subr.mxu0 0.0
    %1255 = vmatpush1.msra.mxu0 0.0
    %1256 = vmatprep.subr.mxu0 0.0
    %1257 = vmatpush1.msra.mxu0 0.0
    %1258 = vmatprep.subr.mxu0 0.0
    %1259 = vmatpush1.msra.mxu0 0.0
    %1260 = vmatprep.subr.mxu0 0.0
    %1261 = vmatpush1.msra.mxu0 0.0
    %1262 = vmatprep.subr.mxu0 0.0
    %1263 = vmatpush1.msra.mxu0 0.0
    %1264 = vmatprep.subr.mxu0 0.0
    %1265 = vmatpush1.msra.mxu0 0.0
    %1266 = vmatprep.subr.mxu0 0.0
    %1267 = vmatpush1.msra.mxu0 0.0
    %1268 = vmatprep.subr.mxu0 0.0
    %1269 = vmatpush1.msra.mxu0 0.0
    %1270 = vmatprep.subr.mxu0 0.0
    %1271 = vmatpush1.msra.mxu0 0.0
    %1272 = vmatprep.subr.mxu0 0.0
    %1273 = vmatpush1.msra.mxu0 0.0
    %1274 = vmatprep.subr.mxu0 0.0
    %1275 = vmatpush1.msra.mxu0 0.0
    %1276 = vmatprep.subr.mxu0 0.0
    %1277 = vmatpush1.msra.mxu0 0.0
    %1278 = vmatprep.subr.mxu0 0.0
    %1279 = vmatpush1.msra.mxu0 0.0
    %1280 = vmatprep.mubr.f32.mxu0 0.0
    %1281 = vmatmul.mubr.f32.gmra.mrb[0].mxu0 %v897
    %v1282 = vpop.f32.mrb[0].mxu0
    %v1283 = vadd.f32 0.0, %v1282
    %v1284 = vpop.f32.mrb[0].mxu0
    %v1285 = vadd.f32 0.0, %v1284
    %1286 = vdwg.mxu0
    %1287 = vmatprep.subr.mxu0 0.0
    %1288 = vmatpush1.msra.mxu0 %v839
    %1289 = vmatprep.subr.mxu0 0.0
    %1290 = vmatpush1.msra.mxu0 %v844
    %1291 = vmatprep.subr.mxu0 0.0
    %1292 = vmatpush1.msra.mxu0 0.0
    %1293 = vmatprep.subr.mxu0 0.0
    %1294 = vmatpush1.msra.mxu0 0.0
    %1295 = vmatprep.subr.mxu0 0.0
    %1296 = vmatpush1.msra.mxu0 0.0
    %1297 = vmatprep.subr.mxu0 0.0
    %1298 = vmatpush1.msra.mxu0 0.0
    %1299 = vmatprep.subr.mxu0 0.0
    %1300 = vmatpush1.msra.mxu0 0.0
    %1301 = vmatprep.subr.mxu0 0.0
    %1302 = vmatpush1.msra.mxu0 0.0
    %1303 = vmatprep.subr.mxu0 0.0
    %1304 = vmatpush1.msra.mxu0 0.0
    %1305 = vmatprep.subr.mxu0 0.0
    %1306 = vmatpush1.msra.mxu0 0.0
    %1307 = vmatprep.subr.mxu0 0.0
    %1308 = vmatpush1.msra.mxu0 0.0
    %1309 = vmatprep.subr.mxu0 0.0
    %1310 = vmatpush1.msra.mxu0 0.0
    %1311 = vmatprep.subr.mxu0 0.0
    %1312 = vmatpush1.msra.mxu0 0.0
    %1313 = vmatprep.subr.mxu0 0.0
    %1314 = vmatpush1.msra.mxu0 0.0
    %1315 = vmatprep.subr.mxu0 0.0
    %1316 = vmatpush1.msra.mxu0 0.0
    %1317 = vmatprep.subr.mxu0 0.0
    %1318 = vmatpush1.msra.mxu0 0.0
    %1319 = vmatprep.subr.mxu0 0.0
    %1320 = vmatpush1.msra.mxu0 0.0
    %1321 = vmatprep.subr.mxu0 0.0
    %1322 = vmatpush1.msra.mxu0 0.0
    %1323 = vmatprep.subr.mxu0 0.0
    %1324 = vmatpush1.msra.mxu0 0.0
    %1325 = vmatprep.subr.mxu0 0.0
    %1326 = vmatpush1.msra.mxu0 0.0
    %1327 = vmatprep.subr.mxu0 0.0
    %1328 = vmatpush1.msra.mxu0 0.0
    %1329 = vmatprep.subr.mxu0 0.0
    %1330 = vmatpush1.msra.mxu0 0.0
    %1331 = vmatprep.subr.mxu0 0.0
    %1332 = vmatpush1.msra.mxu0 0.0
    %1333 = vmatprep.subr.mxu0 0.0
    %1334 = vmatpush1.msra.mxu0 0.0
    %1335 = vmatprep.subr.mxu0 0.0
    %1336 = vmatpush1.msra.mxu0 0.0
    %1337 = vmatprep.subr.mxu0 0.0
    %1338 = vmatpush1.msra.mxu0 0.0
    %1339 = vmatprep.subr.mxu0 0.0
    %1340 = vmatpush1.msra.mxu0 0.0
    %1341 = vmatprep.subr.mxu0 0.0
    %1342 = vmatpush1.msra.mxu0 0.0
    %1343 = vmatprep.subr.mxu0 0.0
    %1344 = vmatpush1.msra.mxu0 0.0
    %1345 = vmatprep.subr.mxu0 0.0
    %1346 = vmatpush1.msra.mxu0 0.0
    %1347 = vmatprep.subr.mxu0 0.0
    %1348 = vmatpush1.msra.mxu0 0.0
    %1349 = vmatprep.subr.mxu0 0.0
    %1350 = vmatpush1.msra.mxu0 0.0
    %1351 = vmatprep.mubr.f32.mxu0 0.0
    %1352 = vmatmul.mubr.f32.gmra.mrb[0].mxu0 %v897
    %v1353 = vpop.f32.mrb[0].mxu0
    %v1354 = vadd.f32 0.0, %v1353
    %v1355 = vpop.f32.mrb[0].mxu0
    %1356 = vdwg.mxu0
    %v1357 = vmul.f32 %v1212, %v1212
    %v1358 = vmul.f32 %v1214, %v1214
    %v1359 = vmul.f32 %v1212, %v1214
    %v1360 = vsub.f32 %v1283, %v1357
    %v1361 = vsub.f32 %v1285, %v1358
    %v1362 = vsub.f32 %v1354, %v1359
    %v1363 = vmul.f32 %v1362, 2.0
    %v1364 = vadd.f32 %v1363, 58.5225
    %v1365 = vadd.f32 %v1360, %v1361
    %v1366 = vadd.f32 %v1365, 58.5225
    %v1367 = vrcp.pop %v1366
    %v1368 = vmul.f32 %v1364, %v1367
    %v1369 = vmul.f32 %v1359, 2.0
    %v1370 = vadd.f32 %v1369, 6.5025
    %v1371 = vadd.f32 %v1357, %v1358
    %v1372 = vadd.f32 %v1371, 6.5025
    %v1373 = vrcp.pop %v1372
    %v1374 = vmul.f32 %v1370, %v1373
    %v1375 = vmul.f32 %v1374, %v1368
    %v1376 = vmul.f32 %v1375, %v895
    %1377 = vadd.xlane.f32.xlu0 %v1376
    %v1378 = vpop.xlane.xlu0 %1377
    %v1379 = vrot.slane %v1378, 4
    %v1380 = vadd.f32 %v1378, %v1379
    %v1381 = vrot.slane %v1380, 2
    %v1382 = vadd.f32 %v1380, %v1381
    %v1383 = vrot.slane %v1382, 1
    %v1384 = vadd.f32 %v1382, %v1383
    %s1385 = vtos %v1384
    %v1386 = vstv %s1385
    %v1387 = vmul.f32 %v1386, 0.027777778
    %vm1388 = vcmp.eq.s32.totalorder %v890, 1
    %v1389 = vsel %vm1388, %v1387, 0.0
    %v1390 = vadd.f32 %v1144, %v1389
    %1391 = vmatprep.subr.mxu0 %v330
    %1392 = vmatpush1.msra.mxu0 %v169
    %1393 = vmatprep.subr.mxu0 %v335
    %1394 = vmatpush1.msra.mxu0 %v174
    %1395 = vmatprep.subr.mxu0 0.0
    %1396 = vmatpush1.msra.mxu0 0.0
    %1397 = vmatprep.subr.mxu0 0.0
    %1398 = vmatpush1.msra.mxu0 0.0
    %1399 = vmatprep.subr.mxu0 0.0
    %1400 = vmatpush1.msra.mxu0 0.0
    %1401 = vmatprep.subr.mxu0 0.0
    %1402 = vmatpush1.msra.mxu0 0.0
    %1403 = vmatprep.subr.mxu0 0.0
    %1404 = vmatpush1.msra.mxu0 0.0
    %1405 = vmatprep.subr.mxu0 0.0
    %1406 = vmatpush1.msra.mxu0 0.0
    %1407 = vmatprep.subr.mxu0 0.0
    %1408 = vmatpush1.msra.mxu0 0.0
    %1409 = vmatprep.subr.mxu0 0.0
    %1410 = vmatpush1.msra.mxu0 0.0
    %1411 = vmatprep.subr.mxu0 0.0
    %1412 = vmatpush1.msra.mxu0 0.0
    %1413 = vmatprep.subr.mxu0 0.0
    %1414 = vmatpush1.msra.mxu0 0.0
    %1415 = vmatprep.subr.mxu0 0.0
    %1416 = vmatpush1.msra.mxu0 0.0
    %1417 = vmatprep.subr.mxu0 0.0
    %1418 = vmatpush1.msra.mxu0 0.0
    %1419 = vmatprep.subr.mxu0 0.0
    %1420 = vmatpush1.msra.mxu0 0.0
    %1421 = vmatprep.subr.mxu0 0.0
    %1422 = vmatpush1.msra.mxu0 0.0
    %1423 = vmatprep.subr.mxu0 0.0
    %1424 = vmatpush1.msra.mxu0 0.0
    %1425 = vmatprep.subr.mxu0 0.0
    %1426 = vmatpush1.msra.mxu0 0.0
    %1427 = vmatprep.subr.mxu0 0.0
    %1428 = vmatpush1.msra.mxu0 0.0
    %1429 = vmatprep.subr.mxu0 0.0
    %1430 = vmatpush1.msra.mxu0 0.0
    %1431 = vmatprep.subr.mxu0 0.0
    %1432 = vmatpush1.msra.mxu0 0.0
    %1433 = vmatprep.subr.mxu0 0.0
    %1434 = vmatpush1.msra.mxu0 0.0
    %1435 = vmatprep.subr.mxu0 0.0
    %1436 = vmatpush1.msra.mxu0 0.0
    %1437 = vmatprep.subr.mxu0 0.0
    %1438 = vmatpush1.msra.mxu0 0.0
    %1439 = vmatprep.subr.mxu0 0.0
    %1440 = vmatpush1.msra.mxu0 0.0
    %1441 = vmatprep.subr.mxu0 0.0
    %1442 = vmatpush1.msra.mxu0 0.0
    %1443 = vmatprep.subr.mxu0 0.0
    %1444 = vmatpush1.msra.mxu0 0.0
    %1445 = vmatprep.subr.mxu0 0.0
    %1446 = vmatpush1.msra.mxu0 0.0
    %1447 = vmatprep.subr.mxu0 0.0
    %1448 = vmatpush1.msra.mxu0 0.0
    %1449 = vmatprep.subr.mxu0 0.0
    %1450 = vmatpush1.msra.mxu0 0.0
    %1451 = vmatprep.subr.mxu0 0.0
    %1452 = vmatpush1.msra.mxu0 0.0
    %1453 = vmatprep.subr.mxu0 0.0
    %1454 = vmatpush1.msra.mxu0 0.0
    %1455 = vmatprep.mubr.f32.mxu0 0.0
    %1456 = vmatmul.mubr.f32.gmra.mrb[0].mxu0 %v897
    %v1457 = vpop.f32.mrb[0].mxu0
    %v1458 = vadd.f32 0.0, %v1457
    %v1459 = vpop.f32.mrb[0].mxu0
    %v1460 = vadd.f32 0.0, %v1459
    %1461 = vdwg.mxu0
    %1462 = vmatprep.subr.mxu0 %v676
    %1463 = vmatpush1.msra.mxu0 %v503
    %1464 = vmatprep.subr.mxu0 %v681
    %1465 = vmatpush1.msra.mxu0 %v508
    %1466 = vmatprep.subr.mxu0 0.0
    %1467 = vmatpush1.msra.mxu0 0.0
    %1468 = vmatprep.subr.mxu0 0.0
    %1469 = vmatpush1.msra.mxu0 0.0
    %1470 = vmatprep.subr.mxu0 0.0
    %1471 = vmatpush1.msra.mxu0 0.0
    %1472 = vmatprep.subr.mxu0 0.0
    %1473 = vmatpush1.msra.mxu0 0.0
    %1474 = vmatprep.subr.mxu0 0.0
    %1475 = vmatpush1.msra.mxu0 0.0
    %1476 = vmatprep.subr.mxu0 0.0
    %1477 = vmatpush1.msra.mxu0 0.0
    %1478 = vmatprep.subr.mxu0 0.0
    %1479 = vmatpush1.msra.mxu0 0.0
    %1480 = vmatprep.subr.mxu0 0.0
    %1481 = vmatpush1.msra.mxu0 0.0
    %1482 = vmatprep.subr.mxu0 0.0
    %1483 = vmatpush1.msra.mxu0 0.0
    %1484 = vmatprep.subr.mxu0 0.0
    %1485 = vmatpush1.msra.mxu0 0.0
    %1486 = vmatprep.subr.mxu0 0.0
    %1487 = vmatpush1.msra.mxu0 0.0
    %1488 = vmatprep.subr.mxu0 0.0
    %1489 = vmatpush1.msra.mxu0 0.0
    %1490 = vmatprep.subr.mxu0 0.0
    %1491 = vmatpush1.msra.mxu0 0.0
    %1492 = vmatprep.subr.mxu0 0.0
    %1493 = vmatpush1.msra.mxu0 0.0
    %1494 = vmatprep.subr.mxu0 0.0
    %1495 = vmatpush1.msra.mxu0 0.0
    %1496 = vmatprep.subr.mxu0 0.0
    %1497 = vmatpush1.msra.mxu0 0.0
    %1498 = vmatprep.subr.mxu0 0.0
    %1499 = vmatpush1.msra.mxu0 0.0
    %1500 = vmatprep.subr.mxu0 0.0
    %1501 = vmatpush1.msra.mxu0 0.0
    %1502 = vmatprep.subr.mxu0 0.0
    %1503 = vmatpush1.msra.mxu0 0.0
    %1504 = vmatprep.subr.mxu0 0.0
    %1505 = vmatpush1.msra.mxu0 0.0
    %1506 = vmatprep.subr.mxu0 0.0
    %1507 = vmatpush1.msra.mxu0 0.0
    %1508 = vmatprep.subr.mxu0 0.0
    %1509 = vmatpush1.msra.mxu0 0.0
    %1510 = vmatprep.subr.mxu0 0.0
    %1511 = vmatpush1.msra.mxu0 0.0
    %1512 = vmatprep.subr.mxu0 0.0
    %1513 = vmatpush1.msra.mxu0 0.0
    %1514 = vmatprep.subr.mxu0 0.0
    %1515 = vmatpush1.msra.mxu0 0.0
    %1516 = vmatprep.subr.mxu0 0.0
    %1517 = vmatpush1.msra.mxu0 0.0
    %1518 = vmatprep.subr.mxu0 0.0
    %1519 = vmatpush1.msra.mxu0 0.0
    %1520 = vmatprep.subr.mxu0 0.0
    %1521 = vmatpush1.msra.mxu0 0.0
    %1522 = vmatprep.subr.mxu0 0.0
    %1523 = vmatpush1.msra.mxu0 0.0
    %1524 = vmatprep.subr.mxu0 0.0
    %1525 = vmatpush1.msra.mxu0 0.0
    %1526 = vmatprep.mubr.f32.mxu0 0.0
    %1527 = vmatmul.mubr.f32.gmra.mrb[0].mxu0 %v897
    %v1528 = vpop.f32.mrb[0].mxu0
    %v1529 = vadd.f32 0.0, %v1528
    %v1530 = vpop.f32.mrb[0].mxu0
    %v1531 = vadd.f32 0.0, %v1530
    %1532 = vdwg.mxu0
    %1533 = vmatprep.subr.mxu0 0.0
    %1534 = vmatpush1.msra.mxu0 %v849
    %1535 = vmatprep.subr.mxu0 0.0
    %1536 = vmatpush1.msra.mxu0 %v854
    %1537 = vmatprep.subr.mxu0 0.0
    %1538 = vmatpush1.msra.mxu0 0.0
    %1539 = vmatprep.subr.mxu0 0.0
    %1540 = vmatpush1.msra.mxu0 0.0
    %1541 = vmatprep.subr.mxu0 0.0
    %1542 = vmatpush1.msra.mxu0 0.0
    %1543 = vmatprep.subr.mxu0 0.0
    %1544 = vmatpush1.msra.mxu0 0.0
    %1545 = vmatprep.subr.mxu0 0.0
    %1546 = vmatpush1.msra.mxu0 0.0
    %1547 = vmatprep.subr.mxu0 0.0
    %1548 = vmatpush1.msra.mxu0 0.0
    %1549 = vmatprep.subr.mxu0 0.0
    %1550 = vmatpush1.msra.mxu0 0.0
    %1551 = vmatprep.subr.mxu0 0.0
    %1552 = vmatpush1.msra.mxu0 0.0
    %1553 = vmatprep.subr.mxu0 0.0
    %1554 = vmatpush1.msra.mxu0 0.0
    %1555 = vmatprep.subr.mxu0 0.0
    %1556 = vmatpush1.msra.mxu0 0.0
    %1557 = vmatprep.subr.mxu0 0.0
    %1558 = vmatpush1.msra.mxu0 0.0
    %1559 = vmatprep.subr.mxu0 0.0
    %1560 = vmatpush1.msra.mxu0 0.0
    %1561 = vmatprep.subr.mxu0 0.0
    %1562 = vmatpush1.msra.mxu0 0.0
    %1563 = vmatprep.subr.mxu0 0.0
    %1564 = vmatpush1.msra.mxu0 0.0
    %1565 = vmatprep.subr.mxu0 0.0
    %1566 = vmatpush1.msra.mxu0 0.0
    %1567 = vmatprep.subr.mxu0 0.0
    %1568 = vmatpush1.msra.mxu0 0.0
    %1569 = vmatprep.subr.mxu0 0.0
    %1570 = vmatpush1.msra.mxu0 0.0
    %1571 = vmatprep.subr.mxu0 0.0
    %1572 = vmatpush1.msra.mxu0 0.0
    %1573 = vmatprep.subr.mxu0 0.0
    %1574 = vmatpush1.msra.mxu0 0.0
    %1575 = vmatprep.subr.mxu0 0.0
    %1576 = vmatpush1.msra.mxu0 0.0
    %1577 = vmatprep.subr.mxu0 0.0
    %1578 = vmatpush1.msra.mxu0 0.0
    %1579 = vmatprep.subr.mxu0 0.0
    %1580 = vmatpush1.msra.mxu0 0.0
    %1581 = vmatprep.subr.mxu0 0.0
    %1582 = vmatpush1.msra.mxu0 0.0
    %1583 = vmatprep.subr.mxu0 0.0
    %1584 = vmatpush1.msra.mxu0 0.0
    %1585 = vmatprep.subr.mxu0 0.0
    %1586 = vmatpush1.msra.mxu0 0.0
    %1587 = vmatprep.subr.mxu0 0.0
    %1588 = vmatpush1.msra.mxu0 0.0
    %1589 = vmatprep.subr.mxu0 0.0
    %1590 = vmatpush1.msra.mxu0 0.0
    %1591 = vmatprep.subr.mxu0 0.0
    %1592 = vmatpush1.msra.mxu0 0.0
    %1593 = vmatprep.subr.mxu0 0.0
    %1594 = vmatpush1.msra.mxu0 0.0
    %1595 = vmatprep.subr.mxu0 0.0
    %1596 = vmatpush1.msra.mxu0 0.0
    %1597 = vmatprep.mubr.f32.mxu0 0.0
    %1598 = vmatmul.mubr.f32.gmra.mrb[0].mxu0 %v897
    %v1599 = vpop.f32.mrb[0].mxu0
    %v1600 = vadd.f32 0.0, %v1599
    %v1601 = vpop.f32.mrb[0].mxu0
    %1602 = vdwg.mxu0
    %v1603 = vmul.f32 %v1458, %v1458
    %v1604 = vmul.f32 %v1460, %v1460
    %v1605 = vmul.f32 %v1458, %v1460
    %v1606 = vsub.f32 %v1529, %v1603
    %v1607 = vsub.f32 %v1531, %v1604
    %v1608 = vsub.f32 %v1600, %v1605
    %v1609 = vmul.f32 %v1608, 2.0
    %v1610 = vadd.f32 %v1609, 58.5225
    %v1611 = vadd.f32 %v1606, %v1607
    %v1612 = vadd.f32 %v1611, 58.5225
    %v1613 = vrcp.pop %v1612
    %v1614 = vmul.f32 %v1610, %v1613
    %v1615 = vmul.f32 %v1605, 2.0
    %v1616 = vadd.f32 %v1615, 6.5025
    %v1617 = vadd.f32 %v1603, %v1604
    %v1618 = vadd.f32 %v1617, 6.5025
    %v1619 = vrcp.pop %v1618
    %v1620 = vmul.f32 %v1616, %v1619
    %v1621 = vmul.f32 %v1620, %v1614
    %v1622 = vmul.f32 %v1621, %v895
    %1623 = vadd.xlane.f32.xlu0 %v1622
    %v1624 = vpop.xlane.xlu0 %1623
    %v1625 = vrot.slane %v1624, 4
    %v1626 = vadd.f32 %v1624, %v1625
    %v1627 = vrot.slane %v1626, 2
    %v1628 = vadd.f32 %v1626, %v1627
    %v1629 = vrot.slane %v1628, 1
    %v1630 = vadd.f32 %v1628, %v1629
    %s1631 = vtos %v1630
    %v1632 = vstv %s1631
    %v1633 = vmul.f32 %v1632, 0.027777778
    %vm1634 = vcmp.eq.s32.totalorder %v890, 2
    %v1635 = vsel %vm1634, %v1633, 0.0
    %v1636 = vadd.f32 %v1390, %v1635
    %1637 = vmatprep.subr.mxu0 %v340
    %1638 = vmatpush1.msra.mxu0 %v179
    %1639 = vmatprep.subr.mxu0 %v345
    %1640 = vmatpush1.msra.mxu0 %v184
    %1641 = vmatprep.subr.mxu0 0.0
    %1642 = vmatpush1.msra.mxu0 0.0
    %1643 = vmatprep.subr.mxu0 0.0
    %1644 = vmatpush1.msra.mxu0 0.0
    %1645 = vmatprep.subr.mxu0 0.0
    %1646 = vmatpush1.msra.mxu0 0.0
    %1647 = vmatprep.subr.mxu0 0.0
    %1648 = vmatpush1.msra.mxu0 0.0
    %1649 = vmatprep.subr.mxu0 0.0
    %1650 = vmatpush1.msra.mxu0 0.0
    %1651 = vmatprep.subr.mxu0 0.0
    %1652 = vmatpush1.msra.mxu0 0.0
    %1653 = vmatprep.subr.mxu0 0.0
    %1654 = vmatpush1.msra.mxu0 0.0
    %1655 = vmatprep.subr.mxu0 0.0
    %1656 = vmatpush1.msra.mxu0 0.0
    %1657 = vmatprep.subr.mxu0 0.0
    %1658 = vmatpush1.msra.mxu0 0.0
    %1659 = vmatprep.subr.mxu0 0.0
    %1660 = vmatpush1.msra.mxu0 0.0
    %1661 = vmatprep.subr.mxu0 0.0
    %1662 = vmatpush1.msra.mxu0 0.0
    %1663 = vmatprep.subr.mxu0 0.0
    %1664 = vmatpush1.msra.mxu0 0.0
    %1665 = vmatprep.subr.mxu0 0.0
    %1666 = vmatpush1.msra.mxu0 0.0
    %1667 = vmatprep.subr.mxu0 0.0
    %1668 = vmatpush1.msra.mxu0 0.0
    %1669 = vmatprep.subr.mxu0 0.0
    %1670 = vmatpush1.msra.mxu0 0.0
    %1671 = vmatprep.subr.mxu0 0.0
    %1672 = vmatpush1.msra.mxu0 0.0
    %1673 = vmatprep.subr.mxu0 0.0
    %1674 = vmatpush1.msra.mxu0 0.0
    %1675 = vmatprep.subr.mxu0 0.0
    %1676 = vmatpush1.msra.mxu0 0.0
    %1677 = vmatprep.subr.mxu0 0.0
    %1678 = vmatpush1.msra.mxu0 0.0
    %1679 = vmatprep.subr.mxu0 0.0
    %1680 = vmatpush1.msra.mxu0 0.0
    %1681 = vmatprep.subr.mxu0 0.0
    %1682 = vmatpush1.msra.mxu0 0.0
    %1683 = vmatprep.subr.mxu0 0.0
    %1684 = vmatpush1.msra.mxu0 0.0
    %1685 = vmatprep.subr.mxu0 0.0
    %1686 = vmatpush1.msra.mxu0 0.0
    %1687 = vmatprep.subr.mxu0 0.0
    %1688 = vmatpush1.msra.mxu0 0.0
    %1689 = vmatprep.subr.mxu0 0.0
    %1690 = vmatpush1.msra.mxu0 0.0
    %1691 = vmatprep.subr.mxu0 0.0
    %1692 = vmatpush1.msra.mxu0 0.0
    %1693 = vmatprep.subr.mxu0 0.0
    %1694 = vmatpush1.msra.mxu0 0.0
    %1695 = vmatprep.subr.mxu0 0.0
    %1696 = vmatpush1.msra.mxu0 0.0
    %1697 = vmatprep.subr.mxu0 0.0
    %1698 = vmatpush1.msra.mxu0 0.0
    %1699 = vmatprep.subr.mxu0 0.0
    %1700 = vmatpush1.msra.mxu0 0.0
    %1701 = vmatprep.mubr.f32.mxu0 0.0
    %1702 = vmatmul.mubr.f32.gmra.mrb[0].mxu0 %v897
    %v1703 = vpop.f32.mrb[0].mxu0
    %v1704 = vadd.f32 0.0, %v1703
    %v1705 = vpop.f32.mrb[0].mxu0
    %v1706 = vadd.f32 0.0, %v1705
    %1707 = vdwg.mxu0
    %1708 = vmatprep.subr.mxu0 %v686
    %1709 = vmatpush1.msra.mxu0 %v513
    %1710 = vmatprep.subr.mxu0 %v691
    %1711 = vmatpush1.msra.mxu0 %v518
    %1712 = vmatprep.subr.mxu0 0.0
    %1713 = vmatpush1.msra.mxu0 0.0
    %1714 = vmatprep.subr.mxu0 0.0
    %1715 = vmatpush1.msra.mxu0 0.0
    %1716 = vmatprep.subr.mxu0 0.0
    %1717 = vmatpush1.msra.mxu0 0.0
    %1718 = vmatprep.subr.mxu0 0.0
    %1719 = vmatpush1.msra.mxu0 0.0
    %1720 = vmatprep.subr.mxu0 0.0
    %1721 = vmatpush1.msra.mxu0 0.0
    %1722 = vmatprep.subr.mxu0 0.0
    %1723 = vmatpush1.msra.mxu0 0.0
    %1724 = vmatprep.subr.mxu0 0.0
    %1725 = vmatpush1.msra.mxu0 0.0
    %1726 = vmatprep.subr.mxu0 0.0
    %1727 = vmatpush1.msra.mxu0 0.0
    %1728 = vmatprep.subr.mxu0 0.0
    %1729 = vmatpush1.msra.mxu0 0.0
    %1730 = vmatprep.subr.mxu0 0.0
    %1731 = vmatpush1.msra.mxu0 0.0
    %1732 = vmatprep.subr.mxu0 0.0
    %1733 = vmatpush1.msra.mxu0 0.0
    %1734 = vmatprep.subr.mxu0 0.0
    %1735 = vmatpush1.msra.mxu0 0.0
    %1736 = vmatprep.subr.mxu0 0.0
    %1737 = vmatpush1.msra.mxu0 0.0
    %1738 = vmatprep.subr.mxu0 0.0
    %1739 = vmatpush1.msra.mxu0 0.0
    %1740 = vmatprep.subr.mxu0 0.0
    %1741 = vmatpush1.msra.mxu0 0.0
    %1742 = vmatprep.subr.mxu0 0.0
    %1743 = vmatpush1.msra.mxu0 0.0
    %1744 = vmatprep.subr.mxu0 0.0
    %1745 = vmatpush1.msra.mxu0 0.0
    %1746 = vmatprep.subr.mxu0 0.0
    %1747 = vmatpush1.msra.mxu0 0.0
    %1748 = vmatprep.subr.mxu0 0.0
    %1749 = vmatpush1.msra.mxu0 0.0
    %1750 = vmatprep.subr.mxu0 0.0
    %1751 = vmatpush1.msra.mxu0 0.0
    %1752 = vmatprep.subr.mxu0 0.0
    %1753 = vmatpush1.msra.mxu0 0.0
    %1754 = vmatprep.subr.mxu0 0.0
    %1755 = vmatpush1.msra.mxu0 0.0
    %1756 = vmatprep.subr.mxu0 0.0
    %1757 = vmatpush1.msra.mxu0 0.0
    %1758 = vmatprep.subr.mxu0 0.0
    %1759 = vmatpush1.msra.mxu0 0.0
    %1760 = vmatprep.subr.mxu0 0.0
    %1761 = vmatpush1.msra.mxu0 0.0
    %1762 = vmatprep.subr.mxu0 0.0
    %1763 = vmatpush1.msra.mxu0 0.0
    %1764 = vmatprep.subr.mxu0 0.0
    %1765 = vmatpush1.msra.mxu0 0.0
    %1766 = vmatprep.subr.mxu0 0.0
    %1767 = vmatpush1.msra.mxu0 0.0
    %1768 = vmatprep.subr.mxu0 0.0
    %1769 = vmatpush1.msra.mxu0 0.0
    %1770 = vmatprep.subr.mxu0 0.0
    %1771 = vmatpush1.msra.mxu0 0.0
    %1772 = vmatprep.mubr.f32.mxu0 0.0
    %1773 = vmatmul.mubr.f32.gmra.mrb[0].mxu0 %v897
    %v1774 = vpop.f32.mrb[0].mxu0
    %v1775 = vadd.f32 0.0, %v1774
    %v1776 = vpop.f32.mrb[0].mxu0
    %v1777 = vadd.f32 0.0, %v1776
    %1778 = vdwg.mxu0
    %1779 = vmatprep.subr.mxu0 0.0
    %1780 = vmatpush1.msra.mxu0 %v859
    %1781 = vmatprep.subr.mxu0 0.0
    %1782 = vmatpush1.msra.mxu0 %v864
    %1783 = vmatprep.subr.mxu0 0.0
    %1784 = vmatpush1.msra.mxu0 0.0
    %1785 = vmatprep.subr.mxu0 0.0
    %1786 = vmatpush1.msra.mxu0 0.0
    %1787 = vmatprep.subr.mxu0 0.0
    %1788 = vmatpush1.msra.mxu0 0.0
    %1789 = vmatprep.subr.mxu0 0.0
    %1790 = vmatpush1.msra.mxu0 0.0
    %1791 = vmatprep.subr.mxu0 0.0
    %1792 = vmatpush1.msra.mxu0 0.0
    %1793 = vmatprep.subr.mxu0 0.0
    %1794 = vmatpush1.msra.mxu0 0.0
    %1795 = vmatprep.subr.mxu0 0.0
    %1796 = vmatpush1.msra.mxu0 0.0
    %1797 = vmatprep.subr.mxu0 0.0
    %1798 = vmatpush1.msra.mxu0 0.0
    %1799 = vmatprep.subr.mxu0 0.0
    %1800 = vmatpush1.msra.mxu0 0.0
    %1801 = vmatprep.subr.mxu0 0.0
    %1802 = vmatpush1.msra.mxu0 0.0
    %1803 = vmatprep.subr.mxu0 0.0
    %1804 = vmatpush1.msra.mxu0 0.0
    %1805 = vmatprep.subr.mxu0 0.0
    %1806 = vmatpush1.msra.mxu0 0.0
    %1807 = vmatprep.subr.mxu0 0.0
    %1808 = vmatpush1.msra.mxu0 0.0
    %1809 = vmatprep.subr.mxu0 0.0
    %1810 = vmatpush1.msra.mxu0 0.0
    %1811 = vmatprep.subr.mxu0 0.0
    %1812 = vmatpush1.msra.mxu0 0.0
    %1813 = vmatprep.subr.mxu0 0.0
    %1814 = vmatpush1.msra.mxu0 0.0
    %1815 = vmatprep.subr.mxu0 0.0
    %1816 = vmatpush1.msra.mxu0 0.0
    %1817 = vmatprep.subr.mxu0 0.0
    %1818 = vmatpush1.msra.mxu0 0.0
    %1819 = vmatprep.subr.mxu0 0.0
    %1820 = vmatpush1.msra.mxu0 0.0
    %1821 = vmatprep.subr.mxu0 0.0
    %1822 = vmatpush1.msra.mxu0 0.0
    %1823 = vmatprep.subr.mxu0 0.0
    %1824 = vmatpush1.msra.mxu0 0.0
    %1825 = vmatprep.subr.mxu0 0.0
    %1826 = vmatpush1.msra.mxu0 0.0
    %1827 = vmatprep.subr.mxu0 0.0
    %1828 = vmatpush1.msra.mxu0 0.0
    %1829 = vmatprep.subr.mxu0 0.0
    %1830 = vmatpush1.msra.mxu0 0.0
    %1831 = vmatprep.subr.mxu0 0.0
    %1832 = vmatpush1.msra.mxu0 0.0
    %1833 = vmatprep.subr.mxu0 0.0
    %1834 = vmatpush1.msra.mxu0 0.0
    %1835 = vmatprep.subr.mxu0 0.0
    %1836 = vmatpush1.msra.mxu0 0.0
    %1837 = vmatprep.subr.mxu0 0.0
    %1838 = vmatpush1.msra.mxu0 0.0
    %1839 = vmatprep.subr.mxu0 0.0
    %1840 = vmatpush1.msra.mxu0 0.0
    %1841 = vmatprep.subr.mxu0 0.0
    %1842 = vmatpush1.msra.mxu0 0.0
    %1843 = vmatprep.mubr.f32.mxu0 0.0
    %1844 = vmatmul.mubr.f32.gmra.mrb[0].mxu0 %v897
    %v1845 = vpop.f32.mrb[0].mxu0
    %v1846 = vadd.f32 0.0, %v1845
    %v1847 = vpop.f32.mrb[0].mxu0
    %1848 = vdwg.mxu0
    %v1849 = vmul.f32 %v1704, %v1704
    %v1850 = vmul.f32 %v1706, %v1706
    %v1851 = vmul.f32 %v1704, %v1706
    %v1852 = vsub.f32 %v1775, %v1849
    %v1853 = vsub.f32 %v1777, %v1850
    %v1854 = vsub.f32 %v1846, %v1851
    %v1855 = vmul.f32 %v1854, 2.0
    %v1856 = vadd.f32 %v1855, 58.5225
    %v1857 = vadd.f32 %v1852, %v1853
    %v1858 = vadd.f32 %v1857, 58.5225
    %v1859 = vrcp.pop %v1858
    %v1860 = vmul.f32 %v1856, %v1859
    %v1861 = vmul.f32 %v1851, 2.0
    %v1862 = vadd.f32 %v1861, 6.5025
    %v1863 = vadd.f32 %v1849, %v1850
    %v1864 = vadd.f32 %v1863, 6.5025
    %v1865 = vrcp.pop %v1864
    %v1866 = vmul.f32 %v1862, %v1865
    %v1867 = vmul.f32 %v1866, %v1860
    %v1868 = vmul.f32 %v1867, %v895
    %1869 = vadd.xlane.f32.xlu0 %v1868
    %v1870 = vpop.xlane.xlu0 %1869
    %v1871 = vrot.slane %v1870, 4
    %v1872 = vadd.f32 %v1870, %v1871
    %v1873 = vrot.slane %v1872, 2
    %v1874 = vadd.f32 %v1872, %v1873
    %v1875 = vrot.slane %v1874, 1
    %v1876 = vadd.f32 %v1874, %v1875
    %s1877 = vtos %v1876
    %v1878 = vstv %s1877
    %v1879 = vmul.f32 %v1878, 0.027777778
    %vm1880 = vcmp.eq.s32.totalorder %v890, 3
    %v1881 = vsel %vm1880, %v1879, 0.0
    %v1882 = vadd.f32 %v1636, %v1881
    %1883 = vmatprep.subr.mxu0 %v350
    %1884 = vmatpush1.msra.mxu0 %v189
    %1885 = vmatprep.subr.mxu0 %v355
    %1886 = vmatpush1.msra.mxu0 %v194
    %1887 = vmatprep.subr.mxu0 0.0
    %1888 = vmatpush1.msra.mxu0 0.0
    %1889 = vmatprep.subr.mxu0 0.0
    %1890 = vmatpush1.msra.mxu0 0.0
    %1891 = vmatprep.subr.mxu0 0.0
    %1892 = vmatpush1.msra.mxu0 0.0
    %1893 = vmatprep.subr.mxu0 0.0
    %1894 = vmatpush1.msra.mxu0 0.0
    %1895 = vmatprep.subr.mxu0 0.0
    %1896 = vmatpush1.msra.mxu0 0.0
    %1897 = vmatprep.subr.mxu0 0.0
    %1898 = vmatpush1.msra.mxu0 0.0
    %1899 = vmatprep.subr.mxu0 0.0
    %1900 = vmatpush1.msra.mxu0 0.0
    %1901 = vmatprep.subr.mxu0 0.0
    %1902 = vmatpush1.msra.mxu0 0.0
    %1903 = vmatprep.subr.mxu0 0.0
    %1904 = vmatpush1.msra.mxu0 0.0
    %1905 = vmatprep.subr.mxu0 0.0
    %1906 = vmatpush1.msra.mxu0 0.0
    %1907 = vmatprep.subr.mxu0 0.0
    %1908 = vmatpush1.msra.mxu0 0.0
    %1909 = vmatprep.subr.mxu0 0.0
    %1910 = vmatpush1.msra.mxu0 0.0
    %1911 = vmatprep.subr.mxu0 0.0
    %1912 = vmatpush1.msra.mxu0 0.0
    %1913 = vmatprep.subr.mxu0 0.0
    %1914 = vmatpush1.msra.mxu0 0.0
    %1915 = vmatprep.subr.mxu0 0.0
    %1916 = vmatpush1.msra.mxu0 0.0
    %1917 = vmatprep.subr.mxu0 0.0
    %1918 = vmatpush1.msra.mxu0 0.0
    %1919 = vmatprep.subr.mxu0 0.0
    %1920 = vmatpush1.msra.mxu0 0.0
    %1921 = vmatprep.subr.mxu0 0.0
    %1922 = vmatpush1.msra.mxu0 0.0
    %1923 = vmatprep.subr.mxu0 0.0
    %1924 = vmatpush1.msra.mxu0 0.0
    %1925 = vmatprep.subr.mxu0 0.0
    %1926 = vmatpush1.msra.mxu0 0.0
    %1927 = vmatprep.subr.mxu0 0.0
    %1928 = vmatpush1.msra.mxu0 0.0
    %1929 = vmatprep.subr.mxu0 0.0
    %1930 = vmatpush1.msra.mxu0 0.0
    %1931 = vmatprep.subr.mxu0 0.0
    %1932 = vmatpush1.msra.mxu0 0.0
    %1933 = vmatprep.subr.mxu0 0.0
    %1934 = vmatpush1.msra.mxu0 0.0
    %1935 = vmatprep.subr.mxu0 0.0
    %1936 = vmatpush1.msra.mxu0 0.0
    %1937 = vmatprep.subr.mxu0 0.0
    %1938 = vmatpush1.msra.mxu0 0.0
    %1939 = vmatprep.subr.mxu0 0.0
    %1940 = vmatpush1.msra.mxu0 0.0
    %1941 = vmatprep.subr.mxu0 0.0
    %1942 = vmatpush1.msra.mxu0 0.0
    %1943 = vmatprep.subr.mxu0 0.0
    %1944 = vmatpush1.msra.mxu0 0.0
    %1945 = vmatprep.subr.mxu0 0.0
    %1946 = vmatpush1.msra.mxu0 0.0
    %1947 = vmatprep.mubr.f32.mxu0 0.0
    %1948 = vmatmul.mubr.f32.gmra.mrb[0].mxu0 %v897
    %v1949 = vpop.f32.mrb[0].mxu0
    %v1950 = vadd.f32 0.0, %v1949
    %v1951 = vpop.f32.mrb[0].mxu0
    %v1952 = vadd.f32 0.0, %v1951
    %1953 = vdwg.mxu0
    %1954 = vmatprep.subr.mxu0 %v696
    %1955 = vmatpush1.msra.mxu0 %v523
    %1956 = vmatprep.subr.mxu0 %v701
    %1957 = vmatpush1.msra.mxu0 %v528
    %1958 = vmatprep.subr.mxu0 0.0
    %1959 = vmatpush1.msra.mxu0 0.0
    %1960 = vmatprep.subr.mxu0 0.0
    %1961 = vmatpush1.msra.mxu0 0.0
    %1962 = vmatprep.subr.mxu0 0.0
    %1963 = vmatpush1.msra.mxu0 0.0
    %1964 = vmatprep.subr.mxu0 0.0
    %1965 = vmatpush1.msra.mxu0 0.0
    %1966 = vmatprep.subr.mxu0 0.0
    %1967 = vmatpush1.msra.mxu0 0.0
    %1968 = vmatprep.subr.mxu0 0.0
    %1969 = vmatpush1.msra.mxu0 0.0
    %1970 = vmatprep.subr.mxu0 0.0
    %1971 = vmatpush1.msra.mxu0 0.0
    %1972 = vmatprep.subr.mxu0 0.0
    %1973 = vmatpush1.msra.mxu0 0.0
    %1974 = vmatprep.subr.mxu0 0.0
    %1975 = vmatpush1.msra.mxu0 0.0
    %1976 = vmatprep.subr.mxu0 0.0
    %1977 = vmatpush1.msra.mxu0 0.0
    %1978 = vmatprep.subr.mxu0 0.0
    %1979 = vmatpush1.msra.mxu0 0.0
    %1980 = vmatprep.subr.mxu0 0.0
    %1981 = vmatpush1.msra.mxu0 0.0
    %1982 = vmatprep.subr.mxu0 0.0
    %1983 = vmatpush1.msra.mxu0 0.0
    %1984 = vmatprep.subr.mxu0 0.0
    %1985 = vmatpush1.msra.mxu0 0.0
    %1986 = vmatprep.subr.mxu0 0.0
    %1987 = vmatpush1.msra.mxu0 0.0
    %1988 = vmatprep.subr.mxu0 0.0
    %1989 = vmatpush1.msra.mxu0 0.0
    %1990 = vmatprep.subr.mxu0 0.0
    %1991 = vmatpush1.msra.mxu0 0.0
    %1992 = vmatprep.subr.mxu0 0.0
    %1993 = vmatpush1.msra.mxu0 0.0
    %1994 = vmatprep.subr.mxu0 0.0
    %1995 = vmatpush1.msra.mxu0 0.0
    %1996 = vmatprep.subr.mxu0 0.0
    %1997 = vmatpush1.msra.mxu0 0.0
    %1998 = vmatprep.subr.mxu0 0.0
    %1999 = vmatpush1.msra.mxu0 0.0
    %2000 = vmatprep.subr.mxu0 0.0
    %2001 = vmatpush1.msra.mxu0 0.0
    %2002 = vmatprep.subr.mxu0 0.0
    %2003 = vmatpush1.msra.mxu0 0.0
    %2004 = vmatprep.subr.mxu0 0.0
    %2005 = vmatpush1.msra.mxu0 0.0
    %2006 = vmatprep.subr.mxu0 0.0
    %2007 = vmatpush1.msra.mxu0 0.0
    %2008 = vmatprep.subr.mxu0 0.0
    %2009 = vmatpush1.msra.mxu0 0.0
    %2010 = vmatprep.subr.mxu0 0.0
    %2011 = vmatpush1.msra.mxu0 0.0
    %2012 = vmatprep.subr.mxu0 0.0
    %2013 = vmatpush1.msra.mxu0 0.0
    %2014 = vmatprep.subr.mxu0 0.0
    %2015 = vmatpush1.msra.mxu0 0.0
    %2016 = vmatprep.subr.mxu0 0.0
    %2017 = vmatpush1.msra.mxu0 0.0
    %2018 = vmatprep.mubr.f32.mxu0 0.0
    %2019 = vmatmul.mubr.f32.gmra.mrb[0].mxu0 %v897
    %v2020 = vpop.f32.mrb[0].mxu0
    %v2021 = vadd.f32 0.0, %v2020
    %v2022 = vpop.f32.mrb[0].mxu0
    %v2023 = vadd.f32 0.0, %v2022
    %2024 = vdwg.mxu0
    %2025 = vmatprep.subr.mxu0 0.0
    %2026 = vmatpush1.msra.mxu0 %v869
    %2027 = vmatprep.subr.mxu0 0.0
    %2028 = vmatpush1.msra.mxu0 %v874
    %2029 = vmatprep.subr.mxu0 0.0
    %2030 = vmatpush1.msra.mxu0 0.0
    %2031 = vmatprep.subr.mxu0 0.0
    %2032 = vmatpush1.msra.mxu0 0.0
    %2033 = vmatprep.subr.mxu0 0.0
    %2034 = vmatpush1.msra.mxu0 0.0
    %2035 = vmatprep.subr.mxu0 0.0
    %2036 = vmatpush1.msra.mxu0 0.0
    %2037 = vmatprep.subr.mxu0 0.0
    %2038 = vmatpush1.msra.mxu0 0.0
    %2039 = vmatprep.subr.mxu0 0.0
    %2040 = vmatpush1.msra.mxu0 0.0
    %2041 = vmatprep.subr.mxu0 0.0
    %2042 = vmatpush1.msra.mxu0 0.0
    %2043 = vmatprep.subr.mxu0 0.0
    %2044 = vmatpush1.msra.mxu0 0.0
    %2045 = vmatprep.subr.mxu0 0.0
    %2046 = vmatpush1.msra.mxu0 0.0
    %2047 = vmatprep.subr.mxu0 0.0
    %2048 = vmatpush1.msra.mxu0 0.0
    %2049 = vmatprep.subr.mxu0 0.0
    %2050 = vmatpush1.msra.mxu0 0.0
    %2051 = vmatprep.subr.mxu0 0.0
    %2052 = vmatpush1.msra.mxu0 0.0
    %2053 = vmatprep.subr.mxu0 0.0
    %2054 = vmatpush1.msra.mxu0 0.0
    %2055 = vmatprep.subr.mxu0 0.0
    %2056 = vmatpush1.msra.mxu0 0.0
    %2057 = vmatprep.subr.mxu0 0.0
    %2058 = vmatpush1.msra.mxu0 0.0
    %2059 = vmatprep.subr.mxu0 0.0
    %2060 = vmatpush1.msra.mxu0 0.0
    %2061 = vmatprep.subr.mxu0 0.0
    %2062 = vmatpush1.msra.mxu0 0.0
    %2063 = vmatprep.subr.mxu0 0.0
    %2064 = vmatpush1.msra.mxu0 0.0
    %2065 = vmatprep.subr.mxu0 0.0
    %2066 = vmatpush1.msra.mxu0 0.0
    %2067 = vmatprep.subr.mxu0 0.0
    %2068 = vmatpush1.msra.mxu0 0.0
    %2069 = vmatprep.subr.mxu0 0.0
    %2070 = vmatpush1.msra.mxu0 0.0
    %2071 = vmatprep.subr.mxu0 0.0
    %2072 = vmatpush1.msra.mxu0 0.0
    %2073 = vmatprep.subr.mxu0 0.0
    %2074 = vmatpush1.msra.mxu0 0.0
    %2075 = vmatprep.subr.mxu0 0.0
    %2076 = vmatpush1.msra.mxu0 0.0
    %2077 = vmatprep.subr.mxu0 0.0
    %2078 = vmatpush1.msra.mxu0 0.0
    %2079 = vmatprep.subr.mxu0 0.0
    %2080 = vmatpush1.msra.mxu0 0.0
    %2081 = vmatprep.subr.mxu0 0.0
    %2082 = vmatpush1.msra.mxu0 0.0
    %2083 = vmatprep.subr.mxu0 0.0
    %2084 = vmatpush1.msra.mxu0 0.0
    %2085 = vmatprep.subr.mxu0 0.0
    %2086 = vmatpush1.msra.mxu0 0.0
    %2087 = vmatprep.subr.mxu0 0.0
    %2088 = vmatpush1.msra.mxu0 0.0
    %2089 = vmatprep.mubr.f32.mxu0 0.0
    %2090 = vmatmul.mubr.f32.gmra.mrb[0].mxu0 %v897
    %v2091 = vpop.f32.mrb[0].mxu0
    %v2092 = vadd.f32 0.0, %v2091
    %v2093 = vpop.f32.mrb[0].mxu0
    %2094 = vdwg.mxu0
    %v2095 = vmul.f32 %v1950, %v1950
    %v2096 = vmul.f32 %v1952, %v1952
    %v2097 = vmul.f32 %v1950, %v1952
    %v2098 = vsub.f32 %v2021, %v2095
    %v2099 = vsub.f32 %v2023, %v2096
    %v2100 = vsub.f32 %v2092, %v2097
    %v2101 = vmul.f32 %v2100, 2.0
    %v2102 = vadd.f32 %v2101, 58.5225
    %v2103 = vadd.f32 %v2098, %v2099
    %v2104 = vadd.f32 %v2103, 58.5225
    %v2105 = vrcp.pop %v2104
    %v2106 = vmul.f32 %v2102, %v2105
    %v2107 = vmul.f32 %v2097, 2.0
    %v2108 = vadd.f32 %v2107, 6.5025
    %v2109 = vadd.f32 %v2095, %v2096
    %v2110 = vadd.f32 %v2109, 6.5025
    %v2111 = vrcp.pop %v2110
    %v2112 = vmul.f32 %v2108, %v2111
    %v2113 = vmul.f32 %v2112, %v2106
    %v2114 = vmul.f32 %v2113, %v895
    %2115 = vadd.xlane.f32.xlu0 %v2114
    %v2116 = vpop.xlane.xlu0 %2115
    %v2117 = vrot.slane %v2116, 4
    %v2118 = vadd.f32 %v2116, %v2117
    %v2119 = vrot.slane %v2118, 2
    %v2120 = vadd.f32 %v2118, %v2119
    %v2121 = vrot.slane %v2120, 1
    %v2122 = vadd.f32 %v2120, %v2121
    %s2123 = vtos %v2122
    %v2124 = vstv %s2123
    %v2125 = vmul.f32 %v2124, 0.027777778
    %vm2126 = vcmp.eq.s32.totalorder %v890, 4
    %v2127 = vsel %vm2126, %v2125, 0.0
    %v2128 = vadd.f32 %v1882, %v2127
    %2129 = vmatprep.subr.mxu0 %v360
    %2130 = vmatpush1.msra.mxu0 %v199
    %2131 = vmatprep.subr.mxu0 %v365
    %2132 = vmatpush1.msra.mxu0 %v204
    %2133 = vmatprep.subr.mxu0 0.0
    %2134 = vmatpush1.msra.mxu0 0.0
    %2135 = vmatprep.subr.mxu0 0.0
    %2136 = vmatpush1.msra.mxu0 0.0
    %2137 = vmatprep.subr.mxu0 0.0
    %2138 = vmatpush1.msra.mxu0 0.0
    %2139 = vmatprep.subr.mxu0 0.0
    %2140 = vmatpush1.msra.mxu0 0.0
    %2141 = vmatprep.subr.mxu0 0.0
    %2142 = vmatpush1.msra.mxu0 0.0
    %2143 = vmatprep.subr.mxu0 0.0
    %2144 = vmatpush1.msra.mxu0 0.0
    %2145 = vmatprep.subr.mxu0 0.0
    %2146 = vmatpush1.msra.mxu0 0.0
    %2147 = vmatprep.subr.mxu0 0.0
    %2148 = vmatpush1.msra.mxu0 0.0
    %2149 = vmatprep.subr.mxu0 0.0
    %2150 = vmatpush1.msra.mxu0 0.0
    %2151 = vmatprep.subr.mxu0 0.0
    %2152 = vmatpush1.msra.mxu0 0.0
    %2153 = vmatprep.subr.mxu0 0.0
    %2154 = vmatpush1.msra.mxu0 0.0
    %2155 = vmatprep.subr.mxu0 0.0
    %2156 = vmatpush1.msra.mxu0 0.0
    %2157 = vmatprep.subr.mxu0 0.0
    %2158 = vmatpush1.msra.mxu0 0.0
    %2159 = vmatprep.subr.mxu0 0.0
    %2160 = vmatpush1.msra.mxu0 0.0
    %2161 = vmatprep.subr.mxu0 0.0
    %2162 = vmatpush1.msra.mxu0 0.0
    %2163 = vmatprep.subr.mxu0 0.0
    %2164 = vmatpush1.msra.mxu0 0.0
    %2165 = vmatprep.subr.mxu0 0.0
    %2166 = vmatpush1.msra.mxu0 0.0
    %2167 = vmatprep.subr.mxu0 0.0
    %2168 = vmatpush1.msra.mxu0 0.0
    %2169 = vmatprep.subr.mxu0 0.0
    %2170 = vmatpush1.msra.mxu0 0.0
    %2171 = vmatprep.subr.mxu0 0.0
    %2172 = vmatpush1.msra.mxu0 0.0
    %2173 = vmatprep.subr.mxu0 0.0
    %2174 = vmatpush1.msra.mxu0 0.0
    %2175 = vmatprep.subr.mxu0 0.0
    %2176 = vmatpush1.msra.mxu0 0.0
    %2177 = vmatprep.subr.mxu0 0.0
    %2178 = vmatpush1.msra.mxu0 0.0
    %2179 = vmatprep.subr.mxu0 0.0
    %2180 = vmatpush1.msra.mxu0 0.0
    %2181 = vmatprep.subr.mxu0 0.0
    %2182 = vmatpush1.msra.mxu0 0.0
    %2183 = vmatprep.subr.mxu0 0.0
    %2184 = vmatpush1.msra.mxu0 0.0
    %2185 = vmatprep.subr.mxu0 0.0
    %2186 = vmatpush1.msra.mxu0 0.0
    %2187 = vmatprep.subr.mxu0 0.0
    %2188 = vmatpush1.msra.mxu0 0.0
    %2189 = vmatprep.subr.mxu0 0.0
    %2190 = vmatpush1.msra.mxu0 0.0
    %2191 = vmatprep.subr.mxu0 0.0
    %2192 = vmatpush1.msra.mxu0 0.0
    %2193 = vmatprep.mubr.f32.mxu0 0.0
    %2194 = vmatmul.mubr.f32.gmra.mrb[0].mxu0 %v897
    %v2195 = vpop.f32.mrb[0].mxu0
    %v2196 = vadd.f32 0.0, %v2195
    %v2197 = vpop.f32.mrb[0].mxu0
    %v2198 = vadd.f32 0.0, %v2197
    %2199 = vdwg.mxu0
    %2200 = vmatprep.subr.mxu0 %v706
    %2201 = vmatpush1.msra.mxu0 %v533
    %2202 = vmatprep.subr.mxu0 %v711
    %2203 = vmatpush1.msra.mxu0 %v538
    %2204 = vmatprep.subr.mxu0 0.0
    %2205 = vmatpush1.msra.mxu0 0.0
    %2206 = vmatprep.subr.mxu0 0.0
    %2207 = vmatpush1.msra.mxu0 0.0
    %2208 = vmatprep.subr.mxu0 0.0
    %2209 = vmatpush1.msra.mxu0 0.0
    %2210 = vmatprep.subr.mxu0 0.0
    %2211 = vmatpush1.msra.mxu0 0.0
    %2212 = vmatprep.subr.mxu0 0.0
    %2213 = vmatpush1.msra.mxu0 0.0
    %2214 = vmatprep.subr.mxu0 0.0
    %2215 = vmatpush1.msra.mxu0 0.0
    %2216 = vmatprep.subr.mxu0 0.0
    %2217 = vmatpush1.msra.mxu0 0.0
    %2218 = vmatprep.subr.mxu0 0.0
    %2219 = vmatpush1.msra.mxu0 0.0
    %2220 = vmatprep.subr.mxu0 0.0
    %2221 = vmatpush1.msra.mxu0 0.0
    %2222 = vmatprep.subr.mxu0 0.0
    %2223 = vmatpush1.msra.mxu0 0.0
    %2224 = vmatprep.subr.mxu0 0.0
    %2225 = vmatpush1.msra.mxu0 0.0
    %2226 = vmatprep.subr.mxu0 0.0
    %2227 = vmatpush1.msra.mxu0 0.0
    %2228 = vmatprep.subr.mxu0 0.0
    %2229 = vmatpush1.msra.mxu0 0.0
    %2230 = vmatprep.subr.mxu0 0.0
    %2231 = vmatpush1.msra.mxu0 0.0
    %2232 = vmatprep.subr.mxu0 0.0
    %2233 = vmatpush1.msra.mxu0 0.0
    %2234 = vmatprep.subr.mxu0 0.0
    %2235 = vmatpush1.msra.mxu0 0.0
    %2236 = vmatprep.subr.mxu0 0.0
    %2237 = vmatpush1.msra.mxu0 0.0
    %2238 = vmatprep.subr.mxu0 0.0
    %2239 = vmatpush1.msra.mxu0 0.0
    %2240 = vmatprep.subr.mxu0 0.0
    %2241 = vmatpush1.msra.mxu0 0.0
    %2242 = vmatprep.subr.mxu0 0.0
    %2243 = vmatpush1.msra.mxu0 0.0
    %2244 = vmatprep.subr.mxu0 0.0
    %2245 = vmatpush1.msra.mxu0 0.0
    %2246 = vmatprep.subr.mxu0 0.0
    %2247 = vmatpush1.msra.mxu0 0.0
    %2248 = vmatprep.subr.mxu0 0.0
    %2249 = vmatpush1.msra.mxu0 0.0
    %2250 = vmatprep.subr.mxu0 0.0
    %2251 = vmatpush1.msra.mxu0 0.0
    %2252 = vmatprep.subr.mxu0 0.0
    %2253 = vmatpush1.msra.mxu0 0.0
    %2254 = vmatprep.subr.mxu0 0.0
    %2255 = vmatpush1.msra.mxu0 0.0
    %2256 = vmatprep.subr.mxu0 0.0
    %2257 = vmatpush1.msra.mxu0 0.0
    %2258 = vmatprep.subr.mxu0 0.0
    %2259 = vmatpush1.msra.mxu0 0.0
    %2260 = vmatprep.subr.mxu0 0.0
    %2261 = vmatpush1.msra.mxu0 0.0
    %2262 = vmatprep.subr.mxu0 0.0
    %2263 = vmatpush1.msra.mxu0 0.0
    %2264 = vmatprep.mubr.f32.mxu0 0.0
    %2265 = vmatmul.mubr.f32.gmra.mrb[0].mxu0 %v897
    %v2266 = vpop.f32.mrb[0].mxu0
    %v2267 = vadd.f32 0.0, %v2266
    %v2268 = vpop.f32.mrb[0].mxu0
    %v2269 = vadd.f32 0.0, %v2268
    %2270 = vdwg.mxu0
    %2271 = vmatprep.subr.mxu0 0.0
    %2272 = vmatpush1.msra.mxu0 %v879
    %2273 = vmatprep.subr.mxu0 0.0
    %2274 = vmatpush1.msra.mxu0 %v884
    %2275 = vmatprep.subr.mxu0 0.0
    %2276 = vmatpush1.msra.mxu0 0.0
    %2277 = vmatprep.subr.mxu0 0.0
    %2278 = vmatpush1.msra.mxu0 0.0
    %2279 = vmatprep.subr.mxu0 0.0
    %2280 = vmatpush1.msra.mxu0 0.0
    %2281 = vmatprep.subr.mxu0 0.0
    %2282 = vmatpush1.msra.mxu0 0.0
    %2283 = vmatprep.subr.mxu0 0.0
    %2284 = vmatpush1.msra.mxu0 0.0
    %2285 = vmatprep.subr.mxu0 0.0
    %2286 = vmatpush1.msra.mxu0 0.0
    %2287 = vmatprep.subr.mxu0 0.0
    %2288 = vmatpush1.msra.mxu0 0.0
    %2289 = vmatprep.subr.mxu0 0.0
    %2290 = vmatpush1.msra.mxu0 0.0
    %2291 = vmatprep.subr.mxu0 0.0
    %2292 = vmatpush1.msra.mxu0 0.0
    %2293 = vmatprep.subr.mxu0 0.0
    %2294 = vmatpush1.msra.mxu0 0.0
    %2295 = vmatprep.subr.mxu0 0.0
    %2296 = vmatpush1.msra.mxu0 0.0
    %2297 = vmatprep.subr.mxu0 0.0
    %2298 = vmatpush1.msra.mxu0 0.0
    %2299 = vmatprep.subr.mxu0 0.0
    %2300 = vmatpush1.msra.mxu0 0.0
    %2301 = vmatprep.subr.mxu0 0.0
    %2302 = vmatpush1.msra.mxu0 0.0
    %2303 = vmatprep.subr.mxu0 0.0
    %2304 = vmatpush1.msra.mxu0 0.0
    %2305 = vmatprep.subr.mxu0 0.0
    %2306 = vmatpush1.msra.mxu0 0.0
    %2307 = vmatprep.subr.mxu0 0.0
    %2308 = vmatpush1.msra.mxu0 0.0
    %2309 = vmatprep.subr.mxu0 0.0
    %2310 = vmatpush1.msra.mxu0 0.0
    %2311 = vmatprep.subr.mxu0 0.0
    %2312 = vmatpush1.msra.mxu0 0.0
    %2313 = vmatprep.subr.mxu0 0.0
    %2314 = vmatpush1.msra.mxu0 0.0
    %2315 = vmatprep.subr.mxu0 0.0
    %2316 = vmatpush1.msra.mxu0 0.0
    %2317 = vmatprep.subr.mxu0 0.0
    %2318 = vmatpush1.msra.mxu0 0.0
    %2319 = vmatprep.subr.mxu0 0.0
    %2320 = vmatpush1.msra.mxu0 0.0
    %2321 = vmatprep.subr.mxu0 0.0
    %2322 = vmatpush1.msra.mxu0 0.0
    %2323 = vmatprep.subr.mxu0 0.0
    %2324 = vmatpush1.msra.mxu0 0.0
    %2325 = vmatprep.subr.mxu0 0.0
    %2326 = vmatpush1.msra.mxu0 0.0
    %2327 = vmatprep.subr.mxu0 0.0
    %2328 = vmatpush1.msra.mxu0 0.0
    %2329 = vmatprep.subr.mxu0 0.0
    %2330 = vmatpush1.msra.mxu0 0.0
    %2331 = vmatprep.subr.mxu0 0.0
    %2332 = vmatpush1.msra.mxu0 0.0
    %2333 = vmatprep.subr.mxu0 0.0
    %2334 = vmatpush1.msra.mxu0 0.0
    %2335 = vmatprep.mubr.f32.mxu0 0.0
    %2336 = vmatmul.mubr.f32.gmra.mrb[0].mxu0 %v897
    %v2337 = vpop.f32.mrb[0].mxu0
    %v2338 = vadd.f32 0.0, %v2337
    %v2339 = vpop.f32.mrb[0].mxu0
    %2340 = vdwg.mxu0
    %v2341 = vmul.f32 %v2196, %v2196
    %v2342 = vmul.f32 %v2198, %v2198
    %v2343 = vmul.f32 %v2196, %v2198
    %v2344 = vsub.f32 %v2267, %v2341
    %v2345 = vsub.f32 %v2269, %v2342
    %v2346 = vsub.f32 %v2338, %v2343
    %v2347 = vmul.f32 %v2346, 2.0
    %v2348 = vadd.f32 %v2347, 58.5225
    %v2349 = vadd.f32 %v2344, %v2345
    %v2350 = vadd.f32 %v2349, 58.5225
    %v2351 = vrcp.pop %v2350
    %v2352 = vmul.f32 %v2348, %v2351
    %v2353 = vmul.f32 %v2343, 2.0
    %v2354 = vadd.f32 %v2353, 6.5025
    %v2355 = vadd.f32 %v2341, %v2342
    %v2356 = vadd.f32 %v2355, 6.5025
    %v2357 = vrcp.pop %v2356
    %v2358 = vmul.f32 %v2354, %v2357
    %v2359 = vmul.f32 %v2358, %v2352
    %v2360 = vmul.f32 %v2359, %v895
    %2361 = vadd.xlane.f32.xlu0 %v2360
    %v2362 = vpop.xlane.xlu0 %2361
    %v2363 = vrot.slane %v2362, 4
    %v2364 = vadd.f32 %v2362, %v2363
    %v2365 = vrot.slane %v2364, 2
    %v2366 = vadd.f32 %v2364, %v2365
    %v2367 = vrot.slane %v2366, 1
    %v2368 = vadd.f32 %v2366, %v2367
    %s2369 = vtos %v2368
    %v2370 = vstv %s2369
    %v2371 = vmul.f32 %v2370, 0.027777778
    %vm2372 = vcmp.eq.s32.totalorder %v890, 5
    %v2373 = vsel %vm2372, %v2371, 0.0
    %v2374 = vadd.f32 %v2128, %v2373
    %vm2375 = vcmask 40960
    %2376 = vst.msk [vmem:[#allocation2] sm:$0x1] %vm2375, %v2374
    // Predicated region
    $region18: #{tpu_custom_call.1} parent=1 // pred_check
      _
    $region19: #{tpu_custom_call.1} parent=1 // pred_check_branch
      %2378 = sbr.rel (0) target = $region21
    $region20: #{tpu_custom_call.1} parent=1 // pred_region
      %s2380 = ssub.s32 16, 16
      %2381 = vsyncadd [#allocation3], %s2380
      %s2383 = sshll.u32 [#allocation2], 4
      %s2384 = int_to_ptr.vmem [resolvable:$true] %s2383
      %2386 = dma.vmem_to_hbm [thread:$0]  %s2384, 16, %s4, [#allocation3]
    $region21: #{tpu_custom_call.1} parent=1 // pred_fallthru
      _
    // Predicated region
    $region22: #{tpu_custom_call.1} parent=1 // pred_check
      _
    $region23: #{tpu_custom_call.1} parent=1 // pred_check_branch
      %2388 = sbr.rel (0) target = $region25
    $region24: #{tpu_custom_call.1} parent=1 // pred_region
      %2389 = dma.done [#allocation3], 16
    $region25: #{tpu_custom_call.1} parent=1 // pred_fallthru
      _
    %2390 = vsyncpa [#allocation3], 1

</llo_original>
